<compile_context>
chip_gen: v7x
topology: tpu7x:2x2x1
jax: 0.10.0
libtpu: 0.0.40
codegen_flags: <defaults>
</compile_context>

<pallas_src>
import functools
import math

import numpy as np

import jax
import jax.numpy as jnp
from jax import lax
from jax.experimental import pallas as pl
from jax.experimental.pallas import tpu as pltpu

EPS = 1e-5  # nn.BatchNorm2d default eps


# ---------------------------------------------------------------------------
# small helpers
# ---------------------------------------------------------------------------
def _vmem_limit_bytes():
    """Generation-aware VMEM budget (~80% of physical, clamped)."""
    try:
        cap = int(pltpu.get_tpu_info().vmem_capacity_bytes)
    except Exception:
        cap = 64 * 1024 * 1024  # conservative (v7x-sized) fallback
    return max(32 * 1024 * 1024, min(int(cap * 0.8), 112 * 1024 * 1024))


def _choose_lane_tile(P, target=2048):
    """Largest multiple-of-128 tile <= target that divides P, else P (no tiling).

    Never returns a sub-tile that violates the (8,128) block constraint."""
    if P <= target:
        return P
    t = (target // 128) * 128
    for d in range(t, 127, -128):
        if P % d == 0:
            return d
    return P


def _cparams(dim_sem, vmem_bytes):
    return pltpu.CompilerParams(dimension_semantics=dim_sem,
                                vmem_limit_bytes=vmem_bytes)


def _partial_stats(o):
    """(C', 2): col 0 = per-channel sum, col 1 = per-channel sum of squares."""
    return jnp.concatenate([jnp.sum(o, axis=1, keepdims=True),
                            jnp.sum(o * o, axis=1, keepdims=True)], axis=1)


def _accumulate_stats(st_ref, part, r):
    """Accumulate partial stats into a resident output block across grid axis r."""
    @pl.when(r == 0)
    def _():
        st_ref[0] = part

    @pl.when(r != 0)
    def _():
        st_ref[0] += part


# ---------------------------------------------------------------------------
# kernels  (all blocks are (channels, spatial): channels on sublanes, space on lanes)
# ---------------------------------------------------------------------------
def _conv1x1_stats_kernel(x_ref, w_ref, o_ref, st_ref, *, matmul_dtype):
    """o = W1^T @ x ; emit per-image BN partial stats (bias dropped: BN cancels it)."""
    r = pl.program_id(1)
    o = jnp.dot(w_ref[...], x_ref[0].astype(matmul_dtype),
                preferred_element_type=jnp.float32)            # (cmid, PT) f32
    o_ref[0] = o.astype(o_ref.dtype)                           # bf16 inter-stage act
    _accumulate_stats(st_ref, _partial_stats(o), r)


def _bnrelu_conv1x1_stats_kernel(h_ref, a_ref, c_ref, w_ref, o_ref, st_ref, *,
                                 matmul_dtype):
    """y = relu(h*a + c) ; o = W3^T @ y ; emit per-image BN partial stats."""
    r = pl.program_id(1)
    y = jnp.maximum(h_ref[0] * a_ref[...] + c_ref[...], 0.0)   # f32 (cmid, PT)
    o = jnp.dot(w_ref[...], y.astype(matmul_dtype),
                preferred_element_type=jnp.float32)            # (cout, PT) f32
    o_ref[0] = o.astype(o_ref.dtype)
    _accumulate_stats(st_ref, _partial_stats(o), r)


def _bnrelu_conv3x3_stats_kernel(h_ref, a_ref, c_ref, w_ref, m_ref, o_ref, st_ref,
                                 *, H, W, cmid, matmul_dtype):
    """Per image: y = relu(h*a+c); 3x3 stride-1 'SAME' conv in channels-on-sublane layout.

    Taps are built in the matmul dtype (half the slab) from XLU lane rolls plus
    precomputed boundary-mask rows; for cmid < 128 the 9 taps are concatenated
    along sublanes into one K=9*cmid matmul, for cmid >= 128 they feed 9
    accumulating K=cmid matmuls (no slab)."""
    # TODO(synk): for very large H*W, row-tile within the image with a 1-row
    # halo instead of one whole image per grid step (bf16 + the no-slab path
    # keeps VMEM well under budget for the feature-map sizes this block sees).
    P = H * W
    y = jnp.maximum(h_ref[0] * a_ref[...] + c_ref[...], 0.0)   # f32 (cmid, P)
    ym = y.astype(matmul_dtype)                                # cast BEFORE taps
    masks = m_ref[...]                                         # (9, P) matmul_dtype
    w = w_ref[...]                                             # (cmid, 9*cmid)

    def make_tap(kh, kw):
        t = kh * 3 + kw
        off = (kh - 1) * W + (kw - 1)          # flattened spatial offset of this tap
        sh = ym if off == 0 else pltpu.roll(ym, shift=(-off) % P, axis=1)
        if t != 4:                             # center tap mask is all-ones: skip
            sh = sh * masks[t:t + 1, :]
        return sh

    if cmid >= 128:
        o = None
        for kh in range(3):
            for kw in range(3):
                t = kh * 3 + kw
                contrib = jnp.dot(w[:, t * cmid:(t + 1) * cmid], make_tap(kh, kw),
                                  preferred_element_type=jnp.float32)
                o = contrib if o is None else o + contrib
    else:
        im = jnp.concatenate([make_tap(kh, kw)
                              for kh in range(3) for kw in range(3)], axis=0)
        o = jnp.dot(w, im, preferred_element_type=jnp.float32)  # (cmid, P) f32

    o_ref[0] = o.astype(o_ref.dtype)
    st_ref[0] = _partial_stats(o)


def _bn_residual_relu_kernel(h_ref, a_ref, c_ref, x_ref, o_ref):
    """out = relu(h*a + c + x)  — BN3 + residual add + ReLU epilogue."""
    o_ref[0] = jnp.maximum(h_ref[0] * a_ref[...] + c_ref[...] + x_ref[0],
                           0.0).astype(o_ref.dtype)


# ---------------------------------------------------------------------------
# wrapper
# ---------------------------------------------------------------------------
def _bn_affine(stats, count, gamma, beta):
    """Fold batch stats into per-channel scale/shift so bn(h) = h*a + c.

    stats: (N, C', 2) per-image (sum, sum_sq).  var is clamped at 0 so
    E[x^2]-mean^2 cancellation can never produce rsqrt(negative)."""
    s = jnp.sum(stats.astype(jnp.float32), axis=0)           # (C', 2)
    mean = s[:, 0] / count
    var = jnp.maximum(s[:, 1] / count - mean * mean, 0.0)
    a = gamma.reshape(-1) * lax.rsqrt(var + EPS)
    c = beta.reshape(-1) - mean * a
    return (a.reshape(-1, 1).astype(jnp.float32),
            c.reshape(-1, 1).astype(jnp.float32))


def _conv3x3_masks(H, W, dtype):
    """(9, H*W) boundary masks for the 3x3 'SAME' conv, spatial on lanes."""
    pos = np.arange(H * W, dtype=np.int32)
    xi, yi = pos % W, pos // W
    rows = []
    for kh in range(3):
        for kw in range(3):
            ok = ((xi + (kw - 1) >= 0) & (xi + (kw - 1) < W) &
                  (yi + (kh - 1) >= 0) & (yi + (kh - 1) < H))
            rows.append(ok)
    return jnp.asarray(np.stack(rows, 0).astype(np.float32), dtype=dtype)


def resblock_forward(x_nchw, params,
                     matmul_dtype=jnp.bfloat16, act_dtype=jnp.bfloat16):
    N, C, H, W = x_nchw.shape
    (w1, b1, g1, be1, w2, b2, g2, be2, w3, b3, g3, be3) = params
    # Training-mode BN subtracts the batch mean right after each conv, so the
    # conv biases cancel exactly -> drop them (only valid for batch-stats BN).
    del b1, b2, b3
    cmid = w1.shape[1]
    cout = w3.shape[1]
    assert C == cout, "residual add requires inchannel == outchannel"

    P = H * W
    M = N * P
    PT = _choose_lane_tile(P)
    NR = P // PT
    vmem = _vmem_limit_bytes()

    # NCHW -> (N, C, H*W): free view; channels on sublanes, space on lanes.
    x_flat = x_nchw.reshape(N, C, P)

    # Transposed weights (output-major) cast once to the MXU dtype.
    w1t = jnp.transpose(w1).astype(matmul_dtype)                          # (cmid, C)
    w2t = jnp.transpose(w2, (2, 0, 1)).reshape(cmid, 9 * cmid).astype(matmul_dtype)
    w3t = jnp.transpose(w3).astype(matmul_dtype)                          # (cout, cmid)
    masks = _conv3x3_masks(H, W, matmul_dtype)                            # (9, P)

    # ---- stage 1: 1x1 conv + per-image BN1 partial stats ---------------------
    h1, st1 = pl.pallas_call(
        functools.partial(_conv1x1_stats_kernel, matmul_dtype=matmul_dtype),
        grid=(N, NR),
        in_specs=[
            pl.BlockSpec((1, C, PT), lambda n, r: (n, 0, r)),
            pl.BlockSpec((cmid, C), lambda n, r: (0, 0)),
        ],
        out_specs=(
            pl.BlockSpec((1, cmid, PT), lambda n, r: (n, 0, r)),
            pl.BlockSpec((1, cmid, 2), lambda n, r: (n, 0, 0)),   # resident acc over r
        ),
        out_shape=(
            jax.ShapeDtypeStruct((N, cmid, P), act_dtype),
            jax.ShapeDtypeStruct((N, cmid, 2), jnp.float32),
        ),
        compiler_params=_cparams(("parallel", "arbitrary"), vmem),
    )(x_flat, w1t)
    a1, c1 = _bn_affine(st1, M, g1, be1)

    # ---- stage 2: BN1+ReLU -> 3x3 conv + per-image BN2 partial stats ---------
    h2, st2 = pl.pallas_call(
        functools.partial(_bnrelu_conv3x3_stats_kernel, H=H, W=W, cmid=cmid,
                          matmul_dtype=matmul_dtype),
        grid=(N,),
        in_specs=[
            pl.BlockSpec((1, cmid, P), lambda n: (n, 0, 0)),
            pl.BlockSpec((cmid, 1), lambda n: (0, 0)),
            pl.BlockSpec((cmid, 1), lambda n: (0, 0)),
            pl.BlockSpec((cmid, 9 * cmid), lambda n: (0, 0)),
            pl.BlockSpec((9, P), lambda n: (0, 0)),
        ],
        out_specs=(
            pl.BlockSpec((1, cmid, P), lambda n: (n, 0, 0)),
            pl.BlockSpec((1, cmid, 2), lambda n: (n, 0, 0)),
        ),
        out_shape=(
            jax.ShapeDtypeStruct((N, cmid, P), act_dtype),
            jax.ShapeDtypeStruct((N, cmid, 2), jnp.float32),
        ),
        compiler_params=_cparams(("parallel",), vmem),
    )(h1, a1, c1, w2t, masks)
    a2, c2 = _bn_affine(st2, M, g2, be2)

    # ---- stage 3: BN2+ReLU -> 1x1 conv + per-image BN3 partial stats ---------
    h3, st3 = pl.pallas_call(
        functools.partial(_bnrelu_conv1x1_stats_kernel, matmul_dtype=matmul_dtype),
        grid=(N, NR),
        in_specs=[
            pl.BlockSpec((1, cmid, PT), lambda n, r: (n, 0, r)),
            pl.BlockSpec((cmid, 1), lambda n, r: (0, 0)),
            pl.BlockSpec((cmid, 1), lambda n, r: (0, 0)),
            pl.BlockSpec((cout, cmid), lambda n, r: (0, 0)),
        ],
        out_specs=(
            pl.BlockSpec((1, cout, PT), lambda n, r: (n, 0, r)),
            pl.BlockSpec((1, cout, 2), lambda n, r: (n, 0, 0)),
        ),
        out_shape=(
            jax.ShapeDtypeStruct((N, cout, P), act_dtype),
            jax.ShapeDtypeStruct((N, cout, 2), jnp.float32),
        ),
        compiler_params=_cparams(("parallel", "arbitrary"), vmem),
    )(h2, a2, c2, w3t)
    a3, c3 = _bn_affine(st3, M, g3, be3)

    # ---- stage 4: BN3 + residual add + ReLU epilogue --------------------------
    out_flat = pl.pallas_call(
        _bn_residual_relu_kernel,
        grid=(N, NR),
        in_specs=[
            pl.BlockSpec((1, cout, PT), lambda n, r: (n, 0, r)),
            pl.BlockSpec((cout, 1), lambda n, r: (0, 0)),
            pl.BlockSpec((cout, 1), lambda n, r: (0, 0)),
            pl.BlockSpec((1, C, PT), lambda n, r: (n, 0, r)),
        ],
        out_specs=pl.BlockSpec((1, cout, PT), lambda n, r: (n, 0, r)),
        out_shape=jax.ShapeDtypeStruct((N, cout, P), x_nchw.dtype),
        compiler_params=_cparams(("parallel", "parallel"), vmem),
    )(h3, a3, c3, x_flat)

    return out_flat.reshape(N, cout, H, W)   # free view back to NCHW


# ---------------------------------------------------------------------------
# parameters / reference
# ---------------------------------------------------------------------------
def init_params(key, cin, cout):
    """Deterministic synthetic parameters (shapes follow the PyTorch module)."""
    cmid = cout // 2
    ks = jax.random.split(key, 12)

    def nrm(k, shape, scale):
        return (scale * jax.random.normal(k, shape)).astype(jnp.float32)

    w1 = nrm(ks[0], (cin, cmid), 1.0 / math.sqrt(cin))           # Conv2d(cin, cmid, 1)
    b1 = nrm(ks[1], (1, cmid), 0.1)
    g1 = 1.0 + nrm(ks[2], (1, cmid), 0.1)                        # BatchNorm2d(cmid)
    be1 = nrm(ks[3], (1, cmid), 0.1)
    w2 = nrm(ks[4], (9, cmid, cmid), 1.0 / math.sqrt(9 * cmid))  # Conv2d(cmid, cmid, 3, pad=1)
    b2 = nrm(ks[5], (1, cmid), 0.1)
    g2 = 1.0 + nrm(ks[6], (1, cmid), 0.1)                        # BatchNorm2d(cmid)
    be2 = nrm(ks[7], (1, cmid), 0.1)
    w3 = nrm(ks[8], (cmid, cout), 1.0 / math.sqrt(cmid))         # Conv2d(cmid, cout, 1)
    b3 = nrm(ks[9], (1, cout), 0.1)
    g3 = 1.0 + nrm(ks[10], (1, cout), 0.1)                       # BatchNorm2d(cout)
    be3 = nrm(ks[11], (1, cout), 0.1)
    return (w1, b1, g1, be1, w2, b2, g2, be2, w3, b3, g3, be3)


def reference_forward(x_nchw, params):
    """Pure-JAX (XLA) reference matching the PyTorch forward (training-mode BN).

    The reference keeps the conv biases; the Pallas path drops them because
    training-mode BN cancels them exactly — the f32 check verifies that."""
    w1, b1, g1, be1, w2, b2, g2, be2, w3, b3, g3, be3 = params

    def bn(h, g, b):
        mean = jnp.mean(h, axis=(0, 2, 3), keepdims=True)
        var = jnp.mean((h - mean) ** 2, axis=(0, 2, 3), keepdims=True)
        return ((h - mean) * lax.rsqrt(var + EPS) * g.reshape(1, -1, 1, 1)
                + b.reshape(1, -1, 1, 1))

    cmid = w1.shape[1]
    h = jnp.einsum('nchw,cd->ndhw', x_nchw, w1) + b1.reshape(1, -1, 1, 1)
    h = jax.nn.relu(bn(h, g1, be1))
    w2_hwio = w2.reshape(3, 3, cmid, cmid)
    h = lax.conv_general_dilated(h, w2_hwio, (1, 1), 'SAME',
                                 dimension_numbers=('NCHW', 'HWIO', 'NCHW'))
    h = h + b2.reshape(1, -1, 1, 1)
    h = jax.nn.relu(bn(h, g2, be2))
    h = jnp.einsum('nchw,cd->ndhw', h, w3) + b3.reshape(1, -1, 1, 1)
    h = bn(h, g3, be3)
    return jax.nn.relu(h + x_nchw)


if __name__ == "__main__":
    key = jax.random.PRNGKey(0)
    kx, kp = jax.random.split(key)

    # batch=2, inchannel=outchannel=32 (residual requires equality), spatial 16x16
    N, C, H, W = 2, 32, 16, 16
    x = jax.random.normal(kx, (N, C, H, W), dtype=jnp.float32)
    params = init_params(kp, C, C)

    ref = jax.block_until_ready(reference_forward(x, params))

    # 1) exactness check: f32 matmuls + f32 inter-stage activations
    fwd_f32 = jax.jit(functools.partial(resblock_forward,
                                        matmul_dtype=jnp.float32,
                                        act_dtype=jnp.float32))
    out_f32 = jax.block_until_ready(fwd_f32(x, params))
    assert out_f32.shape == x.shape and out_f32.dtype == x.dtype
    if not bool(jnp.allclose(out_f32, ref, atol=1e-2, rtol=1e-2)):
        raise AssertionError(
            "f32 kernel/reference mismatch, max abs err = "
            f"{float(jnp.max(jnp.abs(out_f32 - ref)))}")

    # 2) default (production) path: bf16 matmuls + bf16 inter-stage activations
    fwd = jax.jit(resblock_forward)
    out = jax.block_until_ready(fwd(x, params))
    assert out.shape == x.shape and out.dtype == x.dtype
    err_bf16 = float(jnp.max(jnp.abs(out - ref)))
    if not (err_bf16 < 0.5):
        raise AssertionError(f"bf16 kernel diverged, max abs err = {err_bf16}")

    print("KERNEL_OK")
</pallas_src>

<mosaic_0001>
module attributes {stable_mosaic.version = 11 : i64} {
  func.func @_conv1x1_stats_kernel(%arg0: i32, %arg1: i32, %arg2: memref<1x32x256xf32, #tpu.memory_space<vmem>>, %arg3: memref<16x32xf32, #tpu.memory_space<vmem>>, %arg4: memref<1x16x256xf32, #tpu.memory_space<vmem>>, %arg5: memref<1x16x2xf32, #tpu.memory_space<vmem>>) attributes {dimension_semantics = [#tpu.dimension_semantics<parallel>, #tpu.dimension_semantics<arbitrary>], iteration_bounds = array<i64: 2, 1>, scalar_prefetch = 0 : i64, scratch_operands = 0 : i64, tpu.core_type = #tpu.core_type<tc>, window_params = [{transform_indices = @transform_0, window_bounds = array<i64: 1, 32, 256>}, {pipeline_mode = #tpu.pipeline_mode<synchronous>, transform_indices = @transform_1, window_bounds = array<i64: 16, 32>}, {transform_indices = @transform_2, window_bounds = array<i64: 1, 16, 256>}, {transform_indices = @transform_3, window_bounds = array<i64: 1, 16, 2>}]} {
    %c0 = arith.constant 0 : index
    %c0_0 = arith.constant 0 : index
    %0 = vector.load %arg3[%c0, %c0_0] : memref<16x32xf32, #tpu.memory_space<vmem>>, vector<16x32xf32>
    %c0_1 = arith.constant 0 : index
    %c0_2 = arith.constant 0 : index
    %c0_3 = arith.constant 0 : index
    %1 = vector.load %arg2[%c0_1, %c0_2, %c0_3] : memref<1x32x256xf32, #tpu.memory_space<vmem>>, vector<1x32x256xf32>
    %2 = vector.shape_cast %1 : vector<1x32x256xf32> to vector<32x256xf32>
    %cst = arith.constant dense<0.000000e+00> : vector<16x256xf32>
    %3 = tpu.matmul %0, %2, %cst {dimension_numbers = #tpu.dot_dimension_numbers<[1], [0], [0], [1], [0, 0, 1, 1], [], []>} : vector<16x32xf32>, vector<32x256xf32>, vector<16x256xf32> -> vector<16x256xf32>
    %c0_4 = arith.constant 0 : index
    %c0_5 = arith.constant 0 : index
    %c0_6 = arith.constant 0 : index
    %4 = vector.load %arg4[%c0_4, %c0_5, %c0_6] : memref<1x16x256xf32, #tpu.memory_space<vmem>>, vector<1x16x256xf32>
    %5 = vector.shape_cast %4 : vector<1x16x256xf32> to vector<16x256xf32>
    %6 = vector.shape_cast %3 : vector<16x256xf32> to vector<1x16x256xf32>
    tpu.vector_store %arg4[%c0_4, %c0_5, %c0_6], %6 {strides = array<i32>} : memref<1x16x256xf32, #tpu.memory_space<vmem>>, vector<1x16x256xf32>,
    %cst_7 = arith.constant dense<0.000000e+00> : vector<16xf32>
    %7 = vector.multi_reduction <add>, %3, %cst_7 [1] : vector<16x256xf32> to vector<16xf32>
    %8 = vector.shape_cast %7 : vector<16xf32> to vector<16x1xf32>
    %9 = arith.mulf %3, %3 : vector<16x256xf32>
    %cst_8 = arith.constant dense<0.000000e+00> : vector<16xf32>
    %10 = vector.multi_reduction <add>, %9, %cst_8 [1] : vector<16x256xf32> to vector<16xf32>
    %11 = vector.shape_cast %10 : vector<16xf32> to vector<16x1xf32>
    %12 = tpu.concatenate %8, %11 in 1 : vector<16x1xf32>, vector<16x1xf32> -> vector<16x2xf32>
    %c0_i32 = arith.constant 0 : i32
    %13 = arith.cmpi eq, %arg1, %c0_i32 : i32
    %14 = arith.extui %13 : i1 to i32
    %c0_i32_9 = arith.constant 0 : i32
    %15 = arith.cmpi ne, %14, %c0_i32_9 : i32
    scf.if %15 {
      %c0_12 = arith.constant 0 : index
      %c0_13 = arith.constant 0 : index
      %c0_14 = arith.constant 0 : index
      %19 = vector.load %arg5[%c0_12, %c0_13, %c0_14] : memref<1x16x2xf32, #tpu.memory_space<vmem>>, vector<1x16x2xf32>
      %20 = vector.shape_cast %19 : vector<1x16x2xf32> to vector<16x2xf32>
      %21 = vector.shape_cast %12 : vector<16x2xf32> to vector<1x16x2xf32>
      tpu.vector_store %arg5[%c0_12, %c0_13, %c0_14], %21 {strides = array<i32>} : memref<1x16x2xf32, #tpu.memory_space<vmem>>, vector<1x16x2xf32>,
    } else {
    }
    %c0_i32_10 = arith.constant 0 : i32
    %16 = arith.cmpi ne, %arg1, %c0_i32_10 : i32
    %17 = arith.extui %16 : i1 to i32
    %c0_i32_11 = arith.constant 0 : i32
    %18 = arith.cmpi ne, %17, %c0_i32_11 : i32
    scf.if %18 {
      %c0_12 = arith.constant 0 : index
      %c0_13 = arith.constant 0 : index
      %c0_14 = arith.constant 0 : index
      %19 = vector.load %arg5[%c0_12, %c0_13, %c0_14] : memref<1x16x2xf32, #tpu.memory_space<vmem>>, vector<1x16x2xf32>
      %20 = vector.shape_cast %19 : vector<1x16x2xf32> to vector<16x2xf32>
      %21 = arith.addf %20, %12 : vector<16x2xf32>
      %c0_15 = arith.constant 0 : index
      %c0_16 = arith.constant 0 : index
      %c0_17 = arith.constant 0 : index
      %22 = vector.load %arg5[%c0_15, %c0_16, %c0_17] : memref<1x16x2xf32, #tpu.memory_space<vmem>>, vector<1x16x2xf32>
      %23 = vector.shape_cast %22 : vector<1x16x2xf32> to vector<16x2xf32>
      %24 = vector.shape_cast %21 : vector<16x2xf32> to vector<1x16x2xf32>
      tpu.vector_store %arg5[%c0_15, %c0_16, %c0_17], %24 {strides = array<i32>} : memref<1x16x2xf32, #tpu.memory_space<vmem>>, vector<1x16x2xf32>,
    } else {
    }
    return
  }
  func.func @transform_0(%arg0: i32, %arg1: i32) -> (i32, i32, i32) {
    %c0_i32 = arith.constant 0 : i32
    %c0_i32_0 = arith.constant 0 : i32
    return %arg0, %c0_i32, %arg1 : i32, i32, i32
  }
  func.func @transform_1(%arg0: i32, %arg1: i32) -> (i32, i32) {
    %c0_i32 = arith.constant 0 : i32
    %c0_i32_0 = arith.constant 0 : i32
    %c0_i32_1 = arith.constant 0 : i32
    return %c0_i32, %c0_i32_0 : i32, i32
  }
  func.func @transform_2(%arg0: i32, %arg1: i32) -> (i32, i32, i32) {
    %c0_i32 = arith.constant 0 : i32
    %c0_i32_0 = arith.constant 0 : i32
    return %arg0, %c0_i32, %arg1 : i32, i32, i32
  }
  func.func @transform_3(%arg0: i32, %arg1: i32) -> (i32, i32, i32) {
    %c0_i32 = arith.constant 0 : i32
    %c0_i32_0 = arith.constant 0 : i32
    %c0_i32_1 = arith.constant 0 : i32
    return %arg0, %c0_i32, %c0_i32_0 : i32, i32, i32
  }
}

module attributes {stable_mosaic.version = 11 : i64} {
  func.func @_bnrelu_conv3x3_stats_kernel(%arg0: i32, %arg1: memref<1x16x256xf32, #tpu.memory_space<vmem>>, %arg2: memref<16x1xf32, #tpu.memory_space<vmem>>, %arg3: memref<16x1xf32, #tpu.memory_space<vmem>>, %arg4: memref<16x144xf32, #tpu.memory_space<vmem>>, %arg5: memref<9x256xf32, #tpu.memory_space<vmem>>, %arg6: memref<1x16x256xf32, #tpu.memory_space<vmem>>, %arg7: memref<1x16x2xf32, #tpu.memory_space<vmem>>) attributes {dimension_semantics = [#tpu.dimension_semantics<parallel>], iteration_bounds = array<i64: 2>, scalar_prefetch = 0 : i64, scratch_operands = 0 : i64, tpu.core_type = #tpu.core_type<tc>, window_params = [{transform_indices = @transform_0, window_bounds = array<i64: 1, 16, 256>}, {pipeline_mode = #tpu.pipeline_mode<synchronous>, transform_indices = @transform_1, window_bounds = array<i64: 16, 1>}, {pipeline_mode = #tpu.pipeline_mode<synchronous>, transform_indices = @transform_2, window_bounds = array<i64: 16, 1>}, {pipeline_mode = #tpu.pipeline_mode<synchronous>, transform_indices = @transform_3, window_bounds = array<i64: 16, 144>}, {pipeline_mode = #tpu.pipeline_mode<synchronous>, transform_indices = @transform_4, window_bounds = array<i64: 9, 256>}, {transform_indices = @transform_5, window_bounds = array<i64: 1, 16, 256>}, {transform_indices = @transform_6, window_bounds = array<i64: 1, 16, 2>}]} {
    %c0 = arith.constant 0 : index
    %c0_0 = arith.constant 0 : index
    %c0_1 = arith.constant 0 : index
    %0 = vector.load %arg1[%c0, %c0_0, %c0_1] : memref<1x16x256xf32, #tpu.memory_space<vmem>>, vector<1x16x256xf32>
    %1 = vector.shape_cast %0 : vector<1x16x256xf32> to vector<16x256xf32>
    %c0_2 = arith.constant 0 : index
    %c0_3 = arith.constant 0 : index
    %2 = vector.load %arg2[%c0_2, %c0_3] : memref<16x1xf32, #tpu.memory_space<vmem>>, vector<16x1xf32>
    %3 = vector.broadcast %2 : vector<16x1xf32> to vector<16x256xf32>
    %4 = arith.mulf %1, %3 : vector<16x256xf32>
    %c0_4 = arith.constant 0 : index
    %c0_5 = arith.constant 0 : index
    %5 = vector.load %arg3[%c0_4, %c0_5] : memref<16x1xf32, #tpu.memory_space<vmem>>, vector<16x1xf32>
    %6 = vector.broadcast %5 : vector<16x1xf32> to vector<16x256xf32>
    %7 = arith.addf %4, %6 : vector<16x256xf32>
    %cst = arith.constant 0.000000e+00 : f32
    %8 = vector.broadcast %cst : f32 to vector<16x256xf32>
    %9 = arith.maximumf %7, %8 : vector<16x256xf32>
    %c0_6 = arith.constant 0 : index
    %c0_7 = arith.constant 0 : index
    %10 = vector.load %arg5[%c0_6, %c0_7] : memref<9x256xf32, #tpu.memory_space<vmem>>, vector<9x256xf32>
    %c0_8 = arith.constant 0 : index
    %c0_9 = arith.constant 0 : index
    %11 = vector.load %arg4[%c0_8, %c0_9] : memref<16x144xf32, #tpu.memory_space<vmem>>, vector<16x144xf32>
    %c17_i32 = arith.constant 17 : i32
    %12 = tpu.dynamic_rotate %9 by %c17_i32 dim 1 : vector<16x256xf32>, i32 -> vector<16x256xf32>
    %13 = vector.extract_strided_slice %10 {offsets = [0, 0], sizes = [1, 256], strides = [1, 1]} : vector<9x256xf32> to vector<1x256xf32>
    %14 = vector.broadcast %13 : vector<1x256xf32> to vector<16x256xf32>
    %15 = arith.mulf %12, %14 : vector<16x256xf32>
    %c16_i32 = arith.constant 16 : i32
    %16 = tpu.dynamic_rotate %9 by %c16_i32 dim 1 : vector<16x256xf32>, i32 -> vector<16x256xf32>
    %17 = vector.extract_strided_slice %10 {offsets = [1, 0], sizes = [1, 256], strides = [1, 1]} : vector<9x256xf32> to vector<1x256xf32>
    %18 = vector.broadcast %17 : vector<1x256xf32> to vector<16x256xf32>
    %19 = arith.mulf %16, %18 : vector<16x256xf32>
    %c15_i32 = arith.constant 15 : i32
    %20 = tpu.dynamic_rotate %9 by %c15_i32 dim 1 : vector<16x256xf32>, i32 -> vector<16x256xf32>
    %21 = vector.extract_strided_slice %10 {offsets = [2, 0], sizes = [1, 256], strides = [1, 1]} : vector<9x256xf32> to vector<1x256xf32>
    %22 = vector.broadcast %21 : vector<1x256xf32> to vector<16x256xf32>
    %23 = arith.mulf %20, %22 : vector<16x256xf32>
    %c1_i32 = arith.constant 1 : i32
    %24 = tpu.dynamic_rotate %9 by %c1_i32 dim 1 : vector<16x256xf32>, i32 -> vector<16x256xf32>
    %25 = vector.extract_strided_slice %10 {offsets = [3, 0], sizes = [1, 256], strides = [1, 1]} : vector<9x256xf32> to vector<1x256xf32>
    %26 = vector.broadcast %25 : vector<1x256xf32> to vector<16x256xf32>
    %27 = arith.mulf %24, %26 : vector<16x256xf32>
    %c255_i32 = arith.constant 255 : i32
    %28 = tpu.dynamic_rotate %9 by %c255_i32 dim 1 : vector<16x256xf32>, i32 -> vector<16x256xf32>
    %29 = vector.extract_strided_slice %10 {offsets = [5, 0], sizes = [1, 256], strides = [1, 1]} : vector<9x256xf32> to vector<1x256xf32>
    %30 = vector.broadcast %29 : vector<1x256xf32> to vector<16x256xf32>
    %31 = arith.mulf %28, %30 : vector<16x256xf32>
    %c241_i32 = arith.constant 241 : i32
    %32 = tpu.dynamic_rotate %9 by %c241_i32 dim 1 : vector<16x256xf32>, i32 -> vector<16x256xf32>
    %33 = vector.extract_strided_slice %10 {offsets = [6, 0], sizes = [1, 256], strides = [1, 1]} : vector<9x256xf32> to vector<1x256xf32>
    %34 = vector.broadcast %33 : vector<1x256xf32> to vector<16x256xf32>
    %35 = arith.mulf %32, %34 : vector<16x256xf32>
    %c240_i32 = arith.constant 240 : i32
    %36 = tpu.dynamic_rotate %9 by %c240_i32 dim 1 : vector<16x256xf32>, i32 -> vector<16x256xf32>
    %37 = vector.extract_strided_slice %10 {offsets = [7, 0], sizes = [1, 256], strides = [1, 1]} : vector<9x256xf32> to vector<1x256xf32>
    %38 = vector.broadcast %37 : vector<1x256xf32> to vector<16x256xf32>
    %39 = arith.mulf %36, %38 : vector<16x256xf32>
    %c239_i32 = arith.constant 239 : i32
    %40 = tpu.dynamic_rotate %9 by %c239_i32 dim 1 : vector<16x256xf32>, i32 -> vector<16x256xf32>
    %41 = vector.extract_strided_slice %10 {offsets = [8, 0], sizes = [1, 256], strides = [1, 1]} : vector<9x256xf32> to vector<1x256xf32>
    %42 = vector.broadcast %41 : vector<1x256xf32> to vector<16x256xf32>
    %43 = arith.mulf %40, %42 : vector<16x256xf32>
    %44 = tpu.concatenate %15, %19, %23, %27, %9, %31, %35, %39, %43 in 0 : vector<16x256xf32>, vector<16x256xf32>, vector<16x256xf32>, vector<16x256xf32>, vector<16x256xf32>, vector<16x256xf32>, vector<16x256xf32>, vector<16x256xf32>, vector<16x256xf32> -> vector<144x256xf32>
    %cst_10 = arith.constant dense<0.000000e+00> : vector<16x256xf32>
    %45 = tpu.matmul %11, %44, %cst_10 {dimension_numbers = #tpu.dot_dimension_numbers<[1], [0], [0], [1], [0, 0, 1, 1], [], []>} : vector<16x144xf32>, vector<144x256xf32>, vector<16x256xf32> -> vector<16x256xf32>
    %c0_11 = arith.constant 0 : index
    %c0_12 = arith.constant 0 : index
    %c0_13 = arith.constant 0 : index
    %46 = vector.load %arg6[%c0_11, %c0_12, %c0_13] : memref<1x16x256xf32, #tpu.memory_space<vmem>>, vector<1x16x256xf32>
    %47 = vector.shape_cast %46 : vector<1x16x256xf32> to vector<16x256xf32>
    %48 = vector.shape_cast %45 : vector<16x256xf32> to vector<1x16x256xf32>
    tpu.vector_store %arg6[%c0_11, %c0_12, %c0_13], %48 {strides = array<i32>} : memref<1x16x256xf32, #tpu.memory_space<vmem>>, vector<1x16x256xf32>,
    %cst_14 = arith.constant dense<0.000000e+00> : vector<16xf32>
    %49 = vector.multi_reduction <add>, %45, %cst_14 [1] : vector<16x256xf32> to vector<16xf32>
    %50 = vector.shape_cast %49 : vector<16xf32> to vector<16x1xf32>
    %51 = arith.mulf %45, %45 : vector<16x256xf32>
    %cst_15 = arith.constant dense<0.000000e+00> : vector<16xf32>
    %52 = vector.multi_reduction <add>, %51, %cst_15 [1] : vector<16x256xf32> to vector<16xf32>
    %53 = vector.shape_cast %52 : vector<16xf32> to vector<16x1xf32>
    %54 = tpu.concatenate %50, %53 in 1 : vector<16x1xf32>, vector<16x1xf32> -> vector<16x2xf32>
    %c0_16 = arith.constant 0 : index
    %c0_17 = arith.constant 0 : index
    %c0_18 = arith.constant 0 : index
    %55 = vector.load %arg7[%c0_16, %c0_17, %c0_18] : memref<1x16x2xf32, #tpu.memory_space<vmem>>, vector<1x16x2xf32>
    %56 = vector.shape_cast %55 : vector<1x16x2xf32> to vector<16x2xf32>
    %57 = vector.shape_cast %54 : vector<16x2xf32> to vector<1x16x2xf32>
    tpu.vector_store %arg7[%c0_16, %c0_17, %c0_18], %57 {strides = array<i32>} : memref<1x16x2xf32, #tpu.memory_space<vmem>>, vector<1x16x2xf32>,
    return
  }
  func.func @transform_0(%arg0: i32) -> (i32, i32, i32) {
    %c0_i32 = arith.constant 0 : i32
    %c0_i32_0 = arith.constant 0 : i32
    %c0_i32_1 = arith.constant 0 : i32
    return %arg0, %c0_i32, %c0_i32_0 : i32, i32, i32
  }
  func.func @transform_1(%arg0: i32) -> (i32, i32) {
    %c0_i32 = arith.constant 0 : i32
    %c0_i32_0 = arith.constant 0 : i32
    %c0_i32_1 = arith.constant 0 : i32
    return %c0_i32, %c0_i32_0 : i32, i32
  }
  func.func @transform_2(%arg0: i32) -> (i32, i32) {
    %c0_i32 = arith.constant 0 : i32
    %c0_i32_0 = arith.constant 0 : i32
    %c0_i32_1 = arith.constant 0 : i32
    return %c0_i32, %c0_i32_0 : i32, i32
  }
  func.func @transform_3(%arg0: i32) -> (i32, i32) {
    %c0_i32 = arith.constant 0 : i32
    %c0_i32_0 = arith.constant 0 : i32
    %c0_i32_1 = arith.constant 0 : i32
    return %c0_i32, %c0_i32_0 : i32, i32
  }
  func.func @transform_4(%arg0: i32) -> (i32, i32) {
    %c0_i32 = arith.constant 0 : i32
    %c0_i32_0 = arith.constant 0 : i32
    %c0_i32_1 = arith.constant 0 : i32
    return %c0_i32, %c0_i32_0 : i32, i32
  }
  func.func @transform_5(%arg0: i32) -> (i32, i32, i32) {
    %c0_i32 = arith.constant 0 : i32
    %c0_i32_0 = arith.constant 0 : i32
    %c0_i32_1 = arith.constant 0 : i32
    return %arg0, %c0_i32, %c0_i32_0 : i32, i32, i32
  }
  func.func @transform_6(%arg0: i32) -> (i32, i32, i32) {
    %c0_i32 = arith.constant 0 : i32
    %c0_i32_0 = arith.constant 0 : i32
    %c0_i32_1 = arith.constant 0 : i32
    return %arg0, %c0_i32, %c0_i32_0 : i32, i32, i32
  }
}

module attributes {stable_mosaic.version = 11 : i64} {
  func.func @_bnrelu_conv1x1_stats_kernel(%arg0: i32, %arg1: i32, %arg2: memref<1x16x256xf32, #tpu.memory_space<vmem>>, %arg3: memref<16x1xf32, #tpu.memory_space<vmem>>, %arg4: memref<16x1xf32, #tpu.memory_space<vmem>>, %arg5: memref<32x16xf32, #tpu.memory_space<vmem>>, %arg6: memref<1x32x256xf32, #tpu.memory_space<vmem>>, %arg7: memref<1x32x2xf32, #tpu.memory_space<vmem>>) attributes {dimension_semantics = [#tpu.dimension_semantics<parallel>, #tpu.dimension_semantics<arbitrary>], iteration_bounds = array<i64: 2, 1>, scalar_prefetch = 0 : i64, scratch_operands = 0 : i64, tpu.core_type = #tpu.core_type<tc>, window_params = [{transform_indices = @transform_0, window_bounds = array<i64: 1, 16, 256>}, {pipeline_mode = #tpu.pipeline_mode<synchronous>, transform_indices = @transform_1, window_bounds = array<i64: 16, 1>}, {pipeline_mode = #tpu.pipeline_mode<synchronous>, transform_indices = @transform_2, window_bounds = array<i64: 16, 1>}, {pipeline_mode = #tpu.pipeline_mode<synchronous>, transform_indices = @transform_3, window_bounds = array<i64: 32, 16>}, {transform_indices = @transform_4, window_bounds = array<i64: 1, 32, 256>}, {transform_indices = @transform_5, window_bounds = array<i64: 1, 32, 2>}]} {
    %c0 = arith.constant 0 : index
    %c0_0 = arith.constant 0 : index
    %c0_1 = arith.constant 0 : index
    %0 = vector.load %arg2[%c0, %c0_0, %c0_1] : memref<1x16x256xf32, #tpu.memory_space<vmem>>, vector<1x16x256xf32>
    %1 = vector.shape_cast %0 : vector<1x16x256xf32> to vector<16x256xf32>
    %c0_2 = arith.constant 0 : index
    %c0_3 = arith.constant 0 : index
    %2 = vector.load %arg3[%c0_2, %c0_3] : memref<16x1xf32, #tpu.memory_space<vmem>>, vector<16x1xf32>
    %3 = vector.broadcast %2 : vector<16x1xf32> to vector<16x256xf32>
    %4 = arith.mulf %1, %3 : vector<16x256xf32>
    %c0_4 = arith.constant 0 : index
    %c0_5 = arith.constant 0 : index
    %5 = vector.load %arg4[%c0_4, %c0_5] : memref<16x1xf32, #tpu.memory_space<vmem>>, vector<16x1xf32>
    %6 = vector.broadcast %5 : vector<16x1xf32> to vector<16x256xf32>
    %7 = arith.addf %4, %6 : vector<16x256xf32>
    %cst = arith.constant 0.000000e+00 : f32
    %8 = vector.broadcast %cst : f32 to vector<16x256xf32>
    %9 = arith.maximumf %7, %8 : vector<16x256xf32>
    %c0_6 = arith.constant 0 : index
    %c0_7 = arith.constant 0 : index
    %10 = vector.load %arg5[%c0_6, %c0_7] : memref<32x16xf32, #tpu.memory_space<vmem>>, vector<32x16xf32>
    %cst_8 = arith.constant dense<0.000000e+00> : vector<32x256xf32>
    %11 = tpu.matmul %10, %9, %cst_8 {dimension_numbers = #tpu.dot_dimension_numbers<[1], [0], [0], [1], [0, 0, 1, 1], [], []>} : vector<32x16xf32>, vector<16x256xf32>, vector<32x256xf32> -> vector<32x256xf32>
    %c0_9 = arith.constant 0 : index
    %c0_10 = arith.constant 0 : index
    %c0_11 = arith.constant 0 : index
    %12 = vector.load %arg6[%c0_9, %c0_10, %c0_11] : memref<1x32x256xf32, #tpu.memory_space<vmem>>, vector<1x32x256xf32>
    %13 = vector.shape_cast %12 : vector<1x32x256xf32> to vector<32x256xf32>
    %14 = vector.shape_cast %11 : vector<32x256xf32> to vector<1x32x256xf32>
    tpu.vector_store %arg6[%c0_9, %c0_10, %c0_11], %14 {strides = array<i32>} : memref<1x32x256xf32, #tpu.memory_space<vmem>>, vector<1x32x256xf32>,
    %cst_12 = arith.constant dense<0.000000e+00> : vector<32xf32>
    %15 = vector.multi_reduction <add>, %11, %cst_12 [1] : vector<32x256xf32> to vector<32xf32>
    %16 = vector.shape_cast %15 : vector<32xf32> to vector<32x1xf32>
    %17 = arith.mulf %11, %11 : vector<32x256xf32>
    %cst_13 = arith.constant dense<0.000000e+00> : vector<32xf32>
    %18 = vector.multi_reduction <add>, %17, %cst_13 [1] : vector<32x256xf32> to vector<32xf32>
    %19 = vector.shape_cast %18 : vector<32xf32> to vector<32x1xf32>
    %20 = tpu.concatenate %16, %19 in 1 : vector<32x1xf32>, vector<32x1xf32> -> vector<32x2xf32>
    %c0_i32 = arith.constant 0 : i32
    %21 = arith.cmpi eq, %arg1, %c0_i32 : i32
    %22 = arith.extui %21 : i1 to i32
    %c0_i32_14 = arith.constant 0 : i32
    %23 = arith.cmpi ne, %22, %c0_i32_14 : i32
    scf.if %23 {
      %c0_17 = arith.constant 0 : index
      %c0_18 = arith.constant 0 : index
      %c0_19 = arith.constant 0 : index
      %27 = vector.load %arg7[%c0_17, %c0_18, %c0_19] : memref<1x32x2xf32, #tpu.memory_space<vmem>>, vector<1x32x2xf32>
      %28 = vector.shape_cast %27 : vector<1x32x2xf32> to vector<32x2xf32>
      %29 = vector.shape_cast %20 : vector<32x2xf32> to vector<1x32x2xf32>
      tpu.vector_store %arg7[%c0_17, %c0_18, %c0_19], %29 {strides = array<i32>} : memref<1x32x2xf32, #tpu.memory_space<vmem>>, vector<1x32x2xf32>,
    } else {
    }
    %c0_i32_15 = arith.constant 0 : i32
    %24 = arith.cmpi ne, %arg1, %c0_i32_15 : i32
    %25 = arith.extui %24 : i1 to i32
    %c0_i32_16 = arith.constant 0 : i32
    %26 = arith.cmpi ne, %25, %c0_i32_16 : i32
    scf.if %26 {
      %c0_17 = arith.constant 0 : index
      %c0_18 = arith.constant 0 : index
      %c0_19 = arith.constant 0 : index
      %27 = vector.load %arg7[%c0_17, %c0_18, %c0_19] : memref<1x32x2xf32, #tpu.memory_space<vmem>>, vector<1x32x2xf32>
      %28 = vector.shape_cast %27 : vector<1x32x2xf32> to vector<32x2xf32>
      %29 = arith.addf %28, %20 : vector<32x2xf32>
      %c0_20 = arith.constant 0 : index
      %c0_21 = arith.constant 0 : index
      %c0_22 = arith.constant 0 : index
      %30 = vector.load %arg7[%c0_20, %c0_21, %c0_22] : memref<1x32x2xf32, #tpu.memory_space<vmem>>, vector<1x32x2xf32>
      %31 = vector.shape_cast %30 : vector<1x32x2xf32> to vector<32x2xf32>
      %32 = vector.shape_cast %29 : vector<32x2xf32> to vector<1x32x2xf32>
      tpu.vector_store %arg7[%c0_20, %c0_21, %c0_22], %32 {strides = array<i32>} : memref<1x32x2xf32, #tpu.memory_space<vmem>>, vector<1x32x2xf32>,
    } else {
    }
    return
  }
  func.func @transform_0(%arg0: i32, %arg1: i32) -> (i32, i32, i32) {
    %c0_i32 = arith.constant 0 : i32
    %c0_i32_0 = arith.constant 0 : i32
    return %arg0, %c0_i32, %arg1 : i32, i32, i32
  }
  func.func @transform_1(%arg0: i32, %arg1: i32) -> (i32, i32) {
    %c0_i32 = arith.constant 0 : i32
    %c0_i32_0 = arith.constant 0 : i32
    %c0_i32_1 = arith.constant 0 : i32
    return %c0_i32, %c0_i32_0 : i32, i32
  }
  func.func @transform_2(%arg0: i32, %arg1: i32) -> (i32, i32) {
    %c0_i32 = arith.constant 0 : i32
    %c0_i32_0 = arith.constant 0 : i32
    %c0_i32_1 = arith.constant 0 : i32
    return %c0_i32, %c0_i32_0 : i32, i32
  }
  func.func @transform_3(%arg0: i32, %arg1: i32) -> (i32, i32) {
    %c0_i32 = arith.constant 0 : i32
    %c0_i32_0 = arith.constant 0 : i32
    %c0_i32_1 = arith.constant 0 : i32
    return %c0_i32, %c0_i32_0 : i32, i32
  }
  func.func @transform_4(%arg0: i32, %arg1: i32) -> (i32, i32, i32) {
    %c0_i32 = arith.constant 0 : i32
    %c0_i32_0 = arith.constant 0 : i32
    return %arg0, %c0_i32, %arg1 : i32, i32, i32
  }
  func.func @transform_5(%arg0: i32, %arg1: i32) -> (i32, i32, i32) {
    %c0_i32 = arith.constant 0 : i32
    %c0_i32_0 = arith.constant 0 : i32
    %c0_i32_1 = arith.constant 0 : i32
    return %arg0, %c0_i32, %c0_i32_0 : i32, i32, i32
  }
}

module attributes {stable_mosaic.version = 11 : i64} {
  func.func @_bn_residual_relu_kernel(%arg0: i32, %arg1: i32, %arg2: memref<1x32x256xf32, #tpu.memory_space<vmem>>, %arg3: memref<32x1xf32, #tpu.memory_space<vmem>>, %arg4: memref<32x1xf32, #tpu.memory_space<vmem>>, %arg5: memref<1x32x256xf32, #tpu.memory_space<vmem>>, %arg6: memref<1x32x256xf32, #tpu.memory_space<vmem>>) attributes {dimension_semantics = [#tpu.dimension_semantics<parallel>, #tpu.dimension_semantics<parallel>], iteration_bounds = array<i64: 2, 1>, scalar_prefetch = 0 : i64, scratch_operands = 0 : i64, tpu.core_type = #tpu.core_type<tc>, window_params = [{transform_indices = @transform_0, window_bounds = array<i64: 1, 32, 256>}, {pipeline_mode = #tpu.pipeline_mode<synchronous>, transform_indices = @transform_1, window_bounds = array<i64: 32, 1>}, {pipeline_mode = #tpu.pipeline_mode<synchronous>, transform_indices = @transform_2, window_bounds = array<i64: 32, 1>}, {transform_indices = @transform_3, window_bounds = array<i64: 1, 32, 256>}, {transform_indices = @transform_4, window_bounds = array<i64: 1, 32, 256>}]} {
    %c0 = arith.constant 0 : index
    %c0_0 = arith.constant 0 : index
    %c0_1 = arith.constant 0 : index
    %0 = vector.load %arg2[%c0, %c0_0, %c0_1] : memref<1x32x256xf32, #tpu.memory_space<vmem>>, vector<1x32x256xf32>
    %1 = vector.shape_cast %0 : vector<1x32x256xf32> to vector<32x256xf32>
    %c0_2 = arith.constant 0 : index
    %c0_3 = arith.constant 0 : index
    %2 = vector.load %arg3[%c0_2, %c0_3] : memref<32x1xf32, #tpu.memory_space<vmem>>, vector<32x1xf32>
    %3 = vector.broadcast %2 : vector<32x1xf32> to vector<32x256xf32>
    %4 = arith.mulf %1, %3 : vector<32x256xf32>
    %c0_4 = arith.constant 0 : index
    %c0_5 = arith.constant 0 : index
    %5 = vector.load %arg4[%c0_4, %c0_5] : memref<32x1xf32, #tpu.memory_space<vmem>>, vector<32x1xf32>
    %6 = vector.broadcast %5 : vector<32x1xf32> to vector<32x256xf32>
    %7 = arith.addf %4, %6 : vector<32x256xf32>
    %c0_6 = arith.constant 0 : index
    %c0_7 = arith.constant 0 : index
    %c0_8 = arith.constant 0 : index
    %8 = vector.load %arg5[%c0_6, %c0_7, %c0_8] : memref<1x32x256xf32, #tpu.memory_space<vmem>>, vector<1x32x256xf32>
    %9 = vector.shape_cast %8 : vector<1x32x256xf32> to vector<32x256xf32>
    %10 = arith.addf %7, %9 : vector<32x256xf32>
    %cst = arith.constant 0.000000e+00 : f32
    %11 = vector.broadcast %cst : f32 to vector<32x256xf32>
    %12 = arith.maximumf %10, %11 : vector<32x256xf32>
    %c0_9 = arith.constant 0 : index
    %c0_10 = arith.constant 0 : index
    %c0_11 = arith.constant 0 : index
    %13 = vector.load %arg6[%c0_9, %c0_10, %c0_11] : memref<1x32x256xf32, #tpu.memory_space<vmem>>, vector<1x32x256xf32>
    %14 = vector.shape_cast %13 : vector<1x32x256xf32> to vector<32x256xf32>
    %15 = vector.shape_cast %12 : vector<32x256xf32> to vector<1x32x256xf32>
    tpu.vector_store %arg6[%c0_9, %c0_10, %c0_11], %15 {strides = array<i32>} : memref<1x32x256xf32, #tpu.memory_space<vmem>>, vector<1x32x256xf32>,
    return
  }
  func.func @transform_0(%arg0: i32, %arg1: i32) -> (i32, i32, i32) {
    %c0_i32 = arith.constant 0 : i32
    %c0_i32_0 = arith.constant 0 : i32
    return %arg0, %c0_i32, %arg1 : i32, i32, i32
  }
  func.func @transform_1(%arg0: i32, %arg1: i32) -> (i32, i32) {
    %c0_i32 = arith.constant 0 : i32
    %c0_i32_0 = arith.constant 0 : i32
    %c0_i32_1 = arith.constant 0 : i32
    return %c0_i32, %c0_i32_0 : i32, i32
  }
  func.func @transform_2(%arg0: i32, %arg1: i32) -> (i32, i32) {
    %c0_i32 = arith.constant 0 : i32
    %c0_i32_0 = arith.constant 0 : i32
    %c0_i32_1 = arith.constant 0 : i32
    return %c0_i32, %c0_i32_0 : i32, i32
  }
  func.func @transform_3(%arg0: i32, %arg1: i32) -> (i32, i32, i32) {
    %c0_i32 = arith.constant 0 : i32
    %c0_i32_0 = arith.constant 0 : i32
    return %arg0, %c0_i32, %arg1 : i32, i32, i32
  }
  func.func @transform_4(%arg0: i32, %arg1: i32) -> (i32, i32, i32) {
    %c0_i32 = arith.constant 0 : i32
    %c0_i32_0 = arith.constant 0 : i32
    return %arg0, %c0_i32, %arg1 : i32, i32, i32
  }
}

</mosaic_0001>

<llo_original>
// kernel: resblock_forward.4
$region0: #{resblock_forward.4}
  #allocation0 [shape = 'u32[]', space=smem, size = 0x4, offset = 0x4, fixed_abs, tag = 'smem constant byte address 0x4 - core index']
  #allocation1 [shape = 'u32[144,128]{1,0:T(1,128)}', space=vmem, size = 0x12000, scoped, tag = 'internal scratch']
  %s0 = inlined_call_operand.vmem [shape: f32[2,32,256], index: 0, kind: input, shape index: {}]
  %s1 = inlined_call_operand.vmem [shape: f32[16,32], index: 1, kind: input, shape index: {}]
  %s2 = inlined_call_operand.vmem [shape: f32[2,16,256], index: 2, kind: output, shape index: {0}]
  %s3 = inlined_call_operand.vmem [shape: f32[2,16,2], index: 3, kind: output, shape index: {1}]
  %4 = xla_tuple %s2, %s3
  %s5 = sld [smem:[#allocation0]]
  $region57: #{resblock_forward.4} parent=0
    _
  %s7 = ssub.s32 1, %s5
  %s8 = scalar_select 0, %s7, %s5
  loop: start=0, step=1, limit=4
  $region2: #{resblock_forward.4} parent=0 // loop_pre_header
    _
  $region3: #{resblock_forward.4} parent=0 // loop_header
    %s10 = sphi 0, %s14
    %p11 = scmp.ge.s32.totalorder %s10, 4
    %s17 = sphi 0, %s29
    %s18 = sphi 0, %s25
    %s19 = sphi 0, %s17
    %s20 = sphi 0, %s18
    %s21 = sphi 0, %s19
    %s22 = sphi 0, %s20
    %s34 = sphi 0, %s36
    %s37 = sphi 0, %s34
    %s38 = sphi 0, %s37
    %s54 = sphi 0, %s38
    %s58 = sphi 0, %s58
    %s60 = sphi 0, %s58
    %s61 = sphi 0, %s60
    %s75 = sphi 0, %s61
    %s83 = sphi 0, %s85
    %s86 = sphi 0, %s83
    %s87 = sphi 0, %s86
    %s103 = sphi 0, %s87
    %s109 = sphi 0, %s111
    %s112 = sphi 0, %s109
    %s113 = sphi 0, %s112
    %s129 = sphi 0, %s113
  $region4: #{resblock_forward.4} parent=0 // loop_header_branch
    %13 = sbr.rel (%p11) target = $region8
  $region5: #{resblock_forward.4} parent=0 // loop_body
    %s15 = ssub.s32 %s10, 1
    %s16 = ssub.s32 %s10, 2
    %s23 = sadd.s32 1, %s18
    %p24 = scmp.ge.s32.totalorder %s23, 1
    %s25 = scalar_select %p24, 0, %s23
    %s26 = sadd.s32 1, %s17
    %s27 = scalar_select %p24, %s26, %s17
    %p28 = scmp.ge.s32.totalorder %s27, 2
    %s29 = scalar_select %p28, 0, %s27
    %s30 = ssub.s32 %s17, %s29
    %s31 = ssub.s32 %s18, %s25
    %s32 = sor.u32 %s30, %s31
    %p33 = scmp.eq.s32.totalorder %s32, 0
    %s35 = sadd.s32 %s34, 1
    %s36 = scalar_select %p33, %s34, %s35
    %p39 = pneg %p33
    %p40 = scmp.eq.s32.totalorder %s10, 1
    %p41 = por %p39, %p40
    %p42 = scmp.ne.s32.totalorder %s34, %s37
    %p43 = scmp.eq.s32.totalorder %s10, 0
    %p44 = por %p42, %p43
    %p45 = scmp.ne.s32.totalorder %s34, %s37
    %p46 = scmp.eq.s32.totalorder %s15, 1
    %p47 = por %p45, %p46
    %p48 = scmp.ne.s32.totalorder %s37, %s38
    %p49 = scmp.eq.s32.totalorder %s15, 0
    %p50 = por %p48, %p49
    %p51 = scmp.ne.s32.totalorder %s37, %s38
    %p52 = scmp.eq.s32.totalorder %s16, 1
    %p53 = por %p51, %p52
    %p55 = scmp.ne.s32.totalorder %s38, %s54
    %p56 = scmp.eq.s32.totalorder %s16, 0
    %p57 = por %p55, %p56
    %s59 = sadd.s32 %s58, 1
    %p62 = scmp.eq.s32.totalorder %s10, 1
    %p63 = scmp.ne.s32.totalorder %s58, %s60
    %p64 = scmp.eq.s32.totalorder %s10, 0
    %p65 = por %p63, %p64
    %p66 = scmp.ne.s32.totalorder %s58, %s60
    %p67 = scmp.eq.s32.totalorder %s15, 1
    %p68 = por %p66, %p67
    %p69 = scmp.ne.s32.totalorder %s60, %s61
    %p70 = scmp.eq.s32.totalorder %s15, 0
    %p71 = por %p69, %p70
    %p72 = scmp.ne.s32.totalorder %s60, %s61
    %p73 = scmp.eq.s32.totalorder %s16, 1
    %p74 = por %p72, %p73
    %p76 = scmp.ne.s32.totalorder %s61, %s75
    %p77 = scmp.eq.s32.totalorder %s16, 0
    %p78 = por %p76, %p77
    %s79 = ssub.s32 %s17, %s29
    %s80 = ssub.s32 %s18, %s25
    %s81 = sor.u32 %s79, %s80
    %p82 = scmp.eq.s32.totalorder %s81, 0
    %s84 = sadd.s32 %s83, 1
    %s85 = scalar_select %p82, %s83, %s84
    %p88 = pneg %p82
    %p89 = scmp.eq.s32.totalorder %s10, 1
    %p90 = por %p88, %p89
    %p91 = scmp.ne.s32.totalorder %s83, %s86
    %p92 = scmp.eq.s32.totalorder %s10, 0
    %p93 = por %p91, %p92
    %p94 = scmp.ne.s32.totalorder %s83, %s86
    %p95 = scmp.eq.s32.totalorder %s15, 1
    %p96 = por %p94, %p95
    %p97 = scmp.ne.s32.totalorder %s86, %s87
    %p98 = scmp.eq.s32.totalorder %s15, 0
    %p99 = por %p97, %p98
    %p100 = scmp.ne.s32.totalorder %s86, %s87
    %p101 = scmp.eq.s32.totalorder %s16, 1
    %p102 = por %p100, %p101
    %p104 = scmp.ne.s32.totalorder %s87, %s103
    %p105 = scmp.eq.s32.totalorder %s16, 0
    %p106 = por %p104, %p105
    %s107 = ssub.s32 %s17, %s29
    %p108 = scmp.eq.s32.totalorder %s107, 0
    %s110 = sadd.s32 %s109, 1
    %s111 = scalar_select %p108, %s109, %s110
    %p114 = pneg %p108
    %p115 = scmp.eq.s32.totalorder %s10, 1
    %p116 = por %p114, %p115
    %p117 = scmp.ne.s32.totalorder %s109, %s112
    %p118 = scmp.eq.s32.totalorder %s10, 0
    %p119 = por %p117, %p118
    %p120 = scmp.ne.s32.totalorder %s109, %s112
    %p121 = scmp.eq.s32.totalorder %s15, 1
    %p122 = por %p120, %p121
    %p123 = scmp.ne.s32.totalorder %s112, %s113
    %p124 = scmp.eq.s32.totalorder %s15, 0
    %p125 = por %p123, %p124
    %p126 = scmp.ne.s32.totalorder %s112, %s113
    %p127 = scmp.eq.s32.totalorder %s16, 1
    %p128 = por %p126, %p127
    %p130 = scmp.ne.s32.totalorder %s113, %s129
    %p131 = scmp.eq.s32.totalorder %s16, 0
    %p132 = por %p130, %p131
    %p133 = scmp.le.s32.totalorder 1, %s10
    %p134 = scmp.lt.s32.totalorder %s10, 3
    %p135 = pnand %p133, %p134
    %p136 = pneg %p135
    // Predicated region
    $region9: #{resblock_forward.4} parent=5 // pred_check
      _
    $region10: #{resblock_forward.4} parent=5 // pred_check_branch
      %138 = sbr.rel (%p135) target = $region12
    $region11: #{resblock_forward.4} parent=5 // pred_region
      %s139 = ssub.s32 %s10, 1
      // Predicated region
      $region13: #{resblock_forward.4} parent=11 // pred_check
        %p140 = pneg %p71
      $region14: #{resblock_forward.4} parent=11 // pred_check_branch
        %142 = sbr.rel (%p140) target = $region16
      $region15: #{resblock_forward.4} parent=11 // pred_region
        _
      $region16: #{resblock_forward.4} parent=11 // pred_fallthru
        _
    $region12: #{resblock_forward.4} parent=5 // pred_fallthru
      _
    %p143 = scmp.lt.s32.totalorder %s10, 2
    // Predicated region
    $region17: #{resblock_forward.4} parent=5 // pred_check
      %p144 = pneg %p143
    $region18: #{resblock_forward.4} parent=5 // pred_check_branch
      %146 = sbr.rel (%p144) target = $region20
    $region19: #{resblock_forward.4} parent=5 // pred_region
      // Predicated region
      $region21: #{resblock_forward.4} parent=19 // pred_check
        %p147 = pneg %p44
      $region22: #{resblock_forward.4} parent=19 // pred_check_branch
        %149 = sbr.rel (%p147) target = $region24
      $region23: #{resblock_forward.4} parent=19 // pred_region
        %s150 = smul.u32 2, %s18
        %p151 = scmp.lt.s32.totalorder %s17, 1
        %s152 = scalar_select %p151, %s17, 1
        %p153 = scmp.lt.s32.totalorder %s150, 1
        %s154 = scalar_select %p153, %s150, 1
        %s155 = smul.addr %s152, 8
        %s156 = sadd.s32 %s154, %s155
        %s157 = smul.addr %s156, 8
        %s158 = scalar_lea.vmem %s0, %s157
        %s159 = smul.u32 2, %s18
      $region24: #{resblock_forward.4} parent=19 // pred_fallthru
        _
    $region20: #{resblock_forward.4} parent=5 // pred_fallthru
      _
    %p160 = scmp.le.s32.totalorder 1, %s10
    %p161 = scmp.lt.s32.totalorder %s10, 3
    %p162 = pnand %p160, %p161
    %p163 = pneg %p162
    // Predicated region
    $region25: #{resblock_forward.4} parent=5 // pred_check
      _
    $region26: #{resblock_forward.4} parent=5 // pred_check_branch
      %165 = sbr.rel (%p162) target = $region28
    $region27: #{resblock_forward.4} parent=5 // pred_region
      %s166 = ssub.s32 %s10, 1
      %s167 = smul.u32 2, %s20
      %p168 = scmp.lt.s32.totalorder %s19, 1
      %s169 = scalar_select %p168, %s19, 1
      %p170 = scmp.lt.s32.totalorder %s167, 1
      %s171 = scalar_select %p170, %s167, 1
      %s172 = smul.addr %s169, 8
      %s173 = sadd.s32 %s171, %s172
      %s174 = smul.addr %s173, 8
      %s175 = scalar_lea.vmem %s0, %s174
      %p176 = pneg %p50
      %p177 = pneg %p47
      %p178 = pneg %p71
      %p179 = pneg %p68
      %p180 = pneg %p99
      %p181 = pneg %p96
      %s182 = smul.u32 2, %s20
      %p183 = scmp.lt.s32.totalorder %s19, 1
      %s184 = scalar_select %p183, %s19, 1
      %p185 = scmp.lt.s32.totalorder %s182, 1
      %s186 = scalar_select %p185, %s182, 1
      %s187 = smul.addr %s184, 4
      %s188 = sadd.s32 %s186, %s187
      %s189 = smul.addr %s188, 8
      %s190 = scalar_lea.vmem %s2, %s189
      %p191 = pneg %p125
      %p192 = pneg %p122
      %p193 = scmp.lt.s32.totalorder %s19, 1
      %s194 = scalar_select %p193, %s19, 1
      %s195 = smul.addr %s194, 2
      %s196 = smul.addr %s195, 8
      %s197 = scalar_lea.vmem %s3, %s196
      %s198 = smul.u32 2, %s20
      %p199 = scmp.lt.s32.totalorder %s19, 1
      %s200 = scalar_select %p199, %s19, 1
      %p201 = scmp.lt.s32.totalorder %s198, 1
      %s202 = scalar_select %p201, %s198, 1
      %s203 = smul.addr %s200, 8
      %s204 = sadd.s32 %s202, %s203
      %s205 = smul.addr %s204, 8
      %s206 = scalar_lea.vmem %s0, %s205
      %s207 = smul.u32 2, %s20
      %s208 = smul.u32 2, %s20
      %p209 = scmp.lt.s32.totalorder %s19, 1
      %s210 = scalar_select %p209, %s19, 1
      %p211 = scmp.lt.s32.totalorder %s208, 1
      %s212 = scalar_select %p211, %s208, 1
      %s213 = smul.addr %s210, 4
      %s214 = sadd.s32 %s212, %s213
      %s215 = smul.addr %s214, 8
      %s216 = scalar_lea.vmem %s2, %s215
      %s217 = smul.u32 2, %s20
      %p218 = scmp.lt.s32.totalorder %s19, 1
      %s219 = scalar_select %p218, %s19, 1
      %s220 = smul.addr %s219, 2
      %s221 = smul.addr %s220, 8
      %s222 = scalar_lea.vmem %s3, %s221
      %v223 = vld [vmem:[%s1] sm:$0xff]
      %v224 = vld [vmem:[%s1 + $0x8] sm:$0xff]
      %v225 = vld [vmem:[%s206] sm:$0xff]
      %v226 = vld [vmem:[%s206 + $0x8] sm:$0xff]
      %v227 = vld [vmem:[%s206 + $0x10] sm:$0xff]
      %v228 = vld [vmem:[%s206 + $0x18] sm:$0xff]
      %v229 = vld [vmem:[%s206 + $0x20] sm:$0xff]
      %v230 = vld [vmem:[%s206 + $0x28] sm:$0xff]
      %v231 = vld [vmem:[%s206 + $0x30] sm:$0xff]
      %v232 = vld [vmem:[%s206 + $0x38] sm:$0xff]
      %vm233 = vcmask 261120
      %v235 = vsel %vm233, %v223, 0
      %v238 = vsel %vm233, %v224, 0
      %240 = vmatprep.subr.mxu0 %v226
      %241 = vmatpush1.msra.mxu0 %v225
      %242 = vmatprep.subr.mxu0 %v228
      %243 = vmatpush1.msra.mxu0 %v227
      %244 = vmatprep.subr.mxu0 %v230
      %245 = vmatpush1.msra.mxu0 %v229
      %246 = vmatprep.subr.mxu0 %v232
      %247 = vmatpush1.msra.mxu0 %v231
      %248 = vmatprep.subr.mxu0 0.0
      %249 = vmatpush1.msra.mxu0 0.0
      %250 = vmatprep.subr.mxu0 0.0
      %251 = vmatpush1.msra.mxu0 0.0
      %252 = vmatprep.subr.mxu0 0.0
      %253 = vmatpush1.msra.mxu0 0.0
      %254 = vmatprep.subr.mxu0 0.0
      %255 = vmatpush1.msra.mxu0 0.0
      %256 = vmatprep.subr.mxu0 0.0
      %257 = vmatpush1.msra.mxu0 0.0
      %258 = vmatprep.subr.mxu0 0.0
      %259 = vmatpush1.msra.mxu0 0.0
      %260 = vmatprep.subr.mxu0 0.0
      %261 = vmatpush1.msra.mxu0 0.0
      %262 = vmatprep.subr.mxu0 0.0
      %263 = vmatpush1.msra.mxu0 0.0
      %264 = vmatprep.subr.mxu0 0.0
      %265 = vmatpush1.msra.mxu0 0.0
      %266 = vmatprep.subr.mxu0 0.0
      %267 = vmatpush1.msra.mxu0 0.0
      %268 = vmatprep.subr.mxu0 0.0
      %269 = vmatpush1.msra.mxu0 0.0
      %270 = vmatprep.subr.mxu0 0.0
      %271 = vmatpush1.msra.mxu0 0.0
      %272 = vmatprep.subr.mxu0 0.0
      %273 = vmatpush1.msra.mxu0 0.0
      %274 = vmatprep.subr.mxu0 0.0
      %275 = vmatpush1.msra.mxu0 0.0
      %276 = vmatprep.subr.mxu0 0.0
      %277 = vmatpush1.msra.mxu0 0.0
      %278 = vmatprep.subr.mxu0 0.0
      %279 = vmatpush1.msra.mxu0 0.0
      %280 = vmatprep.subr.mxu0 0.0
      %281 = vmatpush1.msra.mxu0 0.0
      %282 = vmatprep.subr.mxu0 0.0
      %283 = vmatpush1.msra.mxu0 0.0
      %284 = vmatprep.subr.mxu0 0.0
      %285 = vmatpush1.msra.mxu0 0.0
      %286 = vmatprep.subr.mxu0 0.0
      %287 = vmatpush1.msra.mxu0 0.0
      %288 = vmatprep.subr.mxu0 0.0
      %289 = vmatpush1.msra.mxu0 0.0
      %290 = vmatprep.subr.mxu0 0.0
      %291 = vmatpush1.msra.mxu0 0.0
      %292 = vmatprep.subr.mxu0 0.0
      %293 = vmatpush1.msra.mxu0 0.0
      %294 = vmatprep.subr.mxu0 0.0
      %295 = vmatpush1.msra.mxu0 0.0
      %296 = vmatprep.subr.mxu0 0.0
      %297 = vmatpush1.msra.mxu0 0.0
      %298 = vmatprep.subr.mxu0 0.0
      %299 = vmatpush1.msra.mxu0 0.0
      %300 = vmatprep.subr.mxu0 0.0
      %301 = vmatpush1.msra.mxu0 0.0
      %302 = vmatprep.subr.mxu0 0.0
      %303 = vmatpush1.msra.mxu0 0.0
      %304 = vmatprep.mubr.f32.mxu0 0.0
      %305 = vmatmul.mubr.f32.gmra.mrb[0].mxu0 %v235
      %v306 = vpop.f32.mrb[0].mxu0
      %v307 = vadd.f32 0.0, %v306
      %v308 = vpop.f32.mrb[0].mxu0
      %v309 = vadd.f32 0.0, %v308
      %310 = vmatprep.mubr.f32.mxu0 0.0
      %311 = vmatmul.mubr.f32.gmra.mrb[0].mxu0 %v238
      %v312 = vpop.f32.mrb[0].mxu0
      %v313 = vadd.f32 0.0, %v312
      %v314 = vpop.f32.mrb[0].mxu0
      %v315 = vadd.f32 0.0, %v314
      %316 = vdwg.mxu0
      %317 = vst [vmem:[%s216] sm:$0xff] %v307
      %318 = vst [vmem:[%s216 + $0x8] sm:$0xff] %v309
      %319 = vst [vmem:[%s216 + $0x10] sm:$0xff] %v313
      %320 = vst [vmem:[%s216 + $0x18] sm:$0xff] %v315
      %v321 = vadd.f32 %v307, %v309
      %322 = vadd.xlane.f32.xlu0 %v321
      %v323 = vpop.xlane.xlu0 %322
      %v324 = vadd.f32 %v313, %v315
      %325 = vadd.xlane.f32.xlu0 %v324
      %v326 = vpop.xlane.xlu0 %325
      %v327 = vmul.f32 %v307, %v307
      %v328 = vmul.f32 %v309, %v309
      %v329 = vmul.f32 %v313, %v313
      %v330 = vmul.f32 %v315, %v315
      %v331 = vadd.f32 %v327, %v328
      %332 = vadd.xlane.f32.xlu0 %v331
      %v333 = vpop.xlane.xlu0 %332
      %v334 = vadd.f32 %v329, %v330
      %335 = vadd.xlane.f32.xlu0 %v334
      %v336 = vpop.xlane.xlu0 %335
      %vm337 = vcmask 7168
      %v338 = vsel %vm337, %v323, %v333
      %v339 = vsel %vm337, %v326, %v336
      %p340 = scmp.eq.s32.totalorder %s20, 0
      // Predicated region
      $region29: #{resblock_forward.4} parent=27 // pred_check
        %p341 = pneg %p340
      $region30: #{resblock_forward.4} parent=27 // pred_check_branch
        %343 = sbr.rel (%p341) target = $region32
      $region31: #{resblock_forward.4} parent=27 // pred_region
        %vm344 = vcmask 15360
        %345 = vst.msk [vmem:[%s222] sm:$0xff] %vm344, %v338
        %346 = vst.msk [vmem:[%s222 + $0x8] sm:$0xff] %vm344, %v339
      $region32: #{resblock_forward.4} parent=27 // pred_fallthru
        _
      %p347 = scmp.ne.s32.totalorder %s20, 0
      // Predicated region
      $region33: #{resblock_forward.4} parent=27 // pred_check
        %p348 = pneg %p347
      $region34: #{resblock_forward.4} parent=27 // pred_check_branch
        %350 = sbr.rel (%p348) target = $region36
      $region35: #{resblock_forward.4} parent=27 // pred_region
        %v351 = vld [vmem:[%s222] sm:$0xff]
        %v352 = vld [vmem:[%s222 + $0x8] sm:$0xff]
        %v353 = vadd.f32 %v351, %v338
        %v354 = vadd.f32 %v352, %v339
        %vm355 = vcmask 15360
        %356 = vst.msk [vmem:[%s222] sm:$0xff] %vm355, %v353
        %357 = vst.msk [vmem:[%s222 + $0x8] sm:$0xff] %vm355, %v354
      $region36: #{resblock_forward.4} parent=27 // pred_fallthru
        _
      %s358 = smul.u32 2, %s20
      %p359 = scmp.lt.s32.totalorder %s19, 1
      %s360 = scalar_select %p359, %s19, 1
      %p361 = scmp.lt.s32.totalorder %s358, 1
      %s362 = scalar_select %p361, %s358, 1
      %s363 = smul.addr %s360, 4
      %s364 = sadd.s32 %s362, %s363
      %s365 = smul.addr %s364, 8
      %s366 = scalar_lea.vmem %s2, %s365
      %p367 = scmp.lt.s32.totalorder %s19, 1
      %s368 = scalar_select %p367, %s19, 1
      %s369 = smul.addr %s368, 2
      %s370 = smul.addr %s369, 8
      %s371 = scalar_lea.vmem %s3, %s370
      // Predicated region
      $region37: #{resblock_forward.4} parent=27 // pred_check
        %p372 = pneg %p96
      $region38: #{resblock_forward.4} parent=27 // pred_check_branch
        %374 = sbr.rel (%p372) target = $region40
      $region39: #{resblock_forward.4} parent=27 // pred_region
        %s375 = smul.u32 2, %s20
      $region40: #{resblock_forward.4} parent=27 // pred_fallthru
        _
      // Predicated region
      $region41: #{resblock_forward.4} parent=27 // pred_check
        %p376 = pneg %p122
      $region42: #{resblock_forward.4} parent=27 // pred_check_branch
        %378 = sbr.rel (%p376) target = $region44
      $region43: #{resblock_forward.4} parent=27 // pred_region
        _
      $region44: #{resblock_forward.4} parent=27 // pred_fallthru
        _
    $region28: #{resblock_forward.4} parent=5 // pred_fallthru
      _
    %p379 = scmp.le.s32.totalorder 2, %s10
    // Predicated region
    $region45: #{resblock_forward.4} parent=5 // pred_check
      %p380 = pneg %p379
    $region46: #{resblock_forward.4} parent=5 // pred_check_branch
      %382 = sbr.rel (%p380) target = $region48
    $region47: #{resblock_forward.4} parent=5 // pred_region
      %s383 = ssub.s32 %s10, 2
      // Predicated region
      $region49: #{resblock_forward.4} parent=47 // pred_check
        %p384 = pneg %p102
      $region50: #{resblock_forward.4} parent=47 // pred_check_branch
        %386 = sbr.rel (%p384) target = $region52
      $region51: #{resblock_forward.4} parent=47 // pred_region
        %s387 = smul.u32 2, %s22
        %p388 = scmp.lt.s32.totalorder %s21, 1
        %s389 = scalar_select %p388, %s21, 1
        %p390 = scmp.lt.s32.totalorder %s387, 1
        %s391 = scalar_select %p390, %s387, 1
        %s392 = smul.addr %s389, 4
        %s393 = sadd.s32 %s391, %s392
        %s394 = smul.addr %s393, 8
        %s395 = scalar_lea.vmem %s2, %s394
      $region52: #{resblock_forward.4} parent=47 // pred_fallthru
        _
      // Predicated region
      $region53: #{resblock_forward.4} parent=47 // pred_check
        %p396 = pneg %p128
      $region54: #{resblock_forward.4} parent=47 // pred_check_branch
        %398 = sbr.rel (%p396) target = $region56
      $region55: #{resblock_forward.4} parent=47 // pred_region
        %p399 = scmp.lt.s32.totalorder %s21, 1
        %s400 = scalar_select %p399, %s21, 1
        %s401 = smul.addr %s400, 2
        %s402 = smul.addr %s401, 8
        %s403 = scalar_lea.vmem %s3, %s402
      $region56: #{resblock_forward.4} parent=47 // pred_fallthru
        _
    $region48: #{resblock_forward.4} parent=5 // pred_fallthru
      _
  $region6: #{resblock_forward.4} parent=0 // loop_footer
    %s14 = sadd.s32 1, %s10
  $region7: #{resblock_forward.4} parent=0 // loop_footer_branch
    %9 = sbr.rel target = $region3
  $region8: #{resblock_forward.4} parent=0 // loop_exit
    _

// kernel: resblock_forward.5
$region0: #{resblock_forward.5}
  #allocation0 [shape = 'u32[]', space=smem, size = 0x4, offset = 0x4, fixed_abs, tag = 'smem constant byte address 0x4 - core index']
  #allocation1 [shape = 'u32[144,128]{1,0:T(1,128)}', space=vmem, size = 0x12000, scoped, tag = 'internal scratch']
  %s0 = inlined_call_operand.vmem [shape: f32[2,16,256], index: 0, kind: input, shape index: {}]
  %s1 = inlined_call_operand.vmem [shape: f32[16,1], index: 1, kind: input, shape index: {}]
  %s2 = inlined_call_operand.vmem [shape: f32[16,1], index: 2, kind: input, shape index: {}]
  %s3 = inlined_call_operand.vmem [shape: f32[16,144], index: 3, kind: input, shape index: {}]
  %s4 = inlined_call_operand.vmem [shape: f32[9,256], index: 4, kind: input, shape index: {}]
  %s5 = inlined_call_operand.vmem [shape: f32[2,16,256], index: 5, kind: output, shape index: {0}]
  %s6 = inlined_call_operand.vmem [shape: f32[2,16,2], index: 6, kind: output, shape index: {1}]
  %7 = xla_tuple %s5, %s6
  %s8 = sld [smem:[#allocation0]]
  $region61: #{resblock_forward.5} parent=0
    _
  %s10 = ssub.s32 1, %s8
  %s11 = scalar_select 0, %s10, %s8
  loop: start=0, step=1, limit=4
  $region2: #{resblock_forward.5} parent=0 // loop_pre_header
    _
  $region3: #{resblock_forward.5} parent=0 // loop_header
    %s13 = sphi 0, %s17
    %p14 = scmp.ge.s32.totalorder %s13, 4
    %s23 = sphi 0, %s25
    %s26 = sphi 0, %s23
    %s27 = sphi 0, %s26
    %s43 = sphi 0, %s27
    %s47 = sphi 0, %s47
    %s49 = sphi 0, %s47
    %s50 = sphi 0, %s49
    %s64 = sphi 0, %s50
    %s68 = sphi 0, %s68
    %s70 = sphi 0, %s68
    %s71 = sphi 0, %s70
    %s85 = sphi 0, %s71
    %s89 = sphi 0, %s89
    %s91 = sphi 0, %s89
    %s92 = sphi 0, %s91
    %s106 = sphi 0, %s92
    %s110 = sphi 0, %s110
    %s112 = sphi 0, %s110
    %s113 = sphi 0, %s112
    %s127 = sphi 0, %s113
    %s133 = sphi 0, %s135
    %s136 = sphi 0, %s133
    %s137 = sphi 0, %s136
    %s153 = sphi 0, %s137
    %s159 = sphi 0, %s161
    %s162 = sphi 0, %s159
    %s163 = sphi 0, %s162
    %s179 = sphi 0, %s163
  $region4: #{resblock_forward.5} parent=0 // loop_header_branch
    %16 = sbr.rel (%p14) target = $region8
  $region5: #{resblock_forward.5} parent=0 // loop_body
    %s18 = ssub.s32 %s13, 1
    %s19 = ssub.s32 %s13, 2
    %s20 = sadd.s32 %s13, 1
    %s21 = ssub.s32 %s13, %s20
    %p22 = scmp.eq.s32.totalorder %s21, 0
    %s24 = sadd.s32 %s23, 1
    %s25 = scalar_select %p22, %s23, %s24
    %p28 = pneg %p22
    %p29 = scmp.eq.s32.totalorder %s13, 1
    %p30 = por %p28, %p29
    %p31 = scmp.ne.s32.totalorder %s23, %s26
    %p32 = scmp.eq.s32.totalorder %s13, 0
    %p33 = por %p31, %p32
    %p34 = scmp.ne.s32.totalorder %s23, %s26
    %p35 = scmp.eq.s32.totalorder %s18, 1
    %p36 = por %p34, %p35
    %p37 = scmp.ne.s32.totalorder %s26, %s27
    %p38 = scmp.eq.s32.totalorder %s18, 0
    %p39 = por %p37, %p38
    %p40 = scmp.ne.s32.totalorder %s26, %s27
    %p41 = scmp.eq.s32.totalorder %s19, 1
    %p42 = por %p40, %p41
    %p44 = scmp.ne.s32.totalorder %s27, %s43
    %p45 = scmp.eq.s32.totalorder %s19, 0
    %p46 = por %p44, %p45
    %s48 = sadd.s32 %s47, 1
    %p51 = scmp.eq.s32.totalorder %s13, 1
    %p52 = scmp.ne.s32.totalorder %s47, %s49
    %p53 = scmp.eq.s32.totalorder %s13, 0
    %p54 = por %p52, %p53
    %p55 = scmp.ne.s32.totalorder %s47, %s49
    %p56 = scmp.eq.s32.totalorder %s18, 1
    %p57 = por %p55, %p56
    %p58 = scmp.ne.s32.totalorder %s49, %s50
    %p59 = scmp.eq.s32.totalorder %s18, 0
    %p60 = por %p58, %p59
    %p61 = scmp.ne.s32.totalorder %s49, %s50
    %p62 = scmp.eq.s32.totalorder %s19, 1
    %p63 = por %p61, %p62
    %p65 = scmp.ne.s32.totalorder %s50, %s64
    %p66 = scmp.eq.s32.totalorder %s19, 0
    %p67 = por %p65, %p66
    %s69 = sadd.s32 %s68, 1
    %p72 = scmp.eq.s32.totalorder %s13, 1
    %p73 = scmp.ne.s32.totalorder %s68, %s70
    %p74 = scmp.eq.s32.totalorder %s13, 0
    %p75 = por %p73, %p74
    %p76 = scmp.ne.s32.totalorder %s68, %s70
    %p77 = scmp.eq.s32.totalorder %s18, 1
    %p78 = por %p76, %p77
    %p79 = scmp.ne.s32.totalorder %s70, %s71
    %p80 = scmp.eq.s32.totalorder %s18, 0
    %p81 = por %p79, %p80
    %p82 = scmp.ne.s32.totalorder %s70, %s71
    %p83 = scmp.eq.s32.totalorder %s19, 1
    %p84 = por %p82, %p83
    %p86 = scmp.ne.s32.totalorder %s71, %s85
    %p87 = scmp.eq.s32.totalorder %s19, 0
    %p88 = por %p86, %p87
    %s90 = sadd.s32 %s89, 1
    %p93 = scmp.eq.s32.totalorder %s13, 1
    %p94 = scmp.ne.s32.totalorder %s89, %s91
    %p95 = scmp.eq.s32.totalorder %s13, 0
    %p96 = por %p94, %p95
    %p97 = scmp.ne.s32.totalorder %s89, %s91
    %p98 = scmp.eq.s32.totalorder %s18, 1
    %p99 = por %p97, %p98
    %p100 = scmp.ne.s32.totalorder %s91, %s92
    %p101 = scmp.eq.s32.totalorder %s18, 0
    %p102 = por %p100, %p101
    %p103 = scmp.ne.s32.totalorder %s91, %s92
    %p104 = scmp.eq.s32.totalorder %s19, 1
    %p105 = por %p103, %p104
    %p107 = scmp.ne.s32.totalorder %s92, %s106
    %p108 = scmp.eq.s32.totalorder %s19, 0
    %p109 = por %p107, %p108
    %s111 = sadd.s32 %s110, 1
    %p114 = scmp.eq.s32.totalorder %s13, 1
    %p115 = scmp.ne.s32.totalorder %s110, %s112
    %p116 = scmp.eq.s32.totalorder %s13, 0
    %p117 = por %p115, %p116
    %p118 = scmp.ne.s32.totalorder %s110, %s112
    %p119 = scmp.eq.s32.totalorder %s18, 1
    %p120 = por %p118, %p119
    %p121 = scmp.ne.s32.totalorder %s112, %s113
    %p122 = scmp.eq.s32.totalorder %s18, 0
    %p123 = por %p121, %p122
    %p124 = scmp.ne.s32.totalorder %s112, %s113
    %p125 = scmp.eq.s32.totalorder %s19, 1
    %p126 = por %p124, %p125
    %p128 = scmp.ne.s32.totalorder %s113, %s127
    %p129 = scmp.eq.s32.totalorder %s19, 0
    %p130 = por %p128, %p129
    %s131 = ssub.s32 %s13, %s20
    %p132 = scmp.eq.s32.totalorder %s131, 0
    %s134 = sadd.s32 %s133, 1
    %s135 = scalar_select %p132, %s133, %s134
    %p138 = pneg %p132
    %p139 = scmp.eq.s32.totalorder %s13, 1
    %p140 = por %p138, %p139
    %p141 = scmp.ne.s32.totalorder %s133, %s136
    %p142 = scmp.eq.s32.totalorder %s13, 0
    %p143 = por %p141, %p142
    %p144 = scmp.ne.s32.totalorder %s133, %s136
    %p145 = scmp.eq.s32.totalorder %s18, 1
    %p146 = por %p144, %p145
    %p147 = scmp.ne.s32.totalorder %s136, %s137
    %p148 = scmp.eq.s32.totalorder %s18, 0
    %p149 = por %p147, %p148
    %p150 = scmp.ne.s32.totalorder %s136, %s137
    %p151 = scmp.eq.s32.totalorder %s19, 1
    %p152 = por %p150, %p151
    %p154 = scmp.ne.s32.totalorder %s137, %s153
    %p155 = scmp.eq.s32.totalorder %s19, 0
    %p156 = por %p154, %p155
    %s157 = ssub.s32 %s13, %s20
    %p158 = scmp.eq.s32.totalorder %s157, 0
    %s160 = sadd.s32 %s159, 1
    %s161 = scalar_select %p158, %s159, %s160
    %p164 = pneg %p158
    %p165 = scmp.eq.s32.totalorder %s13, 1
    %p166 = por %p164, %p165
    %p167 = scmp.ne.s32.totalorder %s159, %s162
    %p168 = scmp.eq.s32.totalorder %s13, 0
    %p169 = por %p167, %p168
    %p170 = scmp.ne.s32.totalorder %s159, %s162
    %p171 = scmp.eq.s32.totalorder %s18, 1
    %p172 = por %p170, %p171
    %p173 = scmp.ne.s32.totalorder %s162, %s163
    %p174 = scmp.eq.s32.totalorder %s18, 0
    %p175 = por %p173, %p174
    %p176 = scmp.ne.s32.totalorder %s162, %s163
    %p177 = scmp.eq.s32.totalorder %s19, 1
    %p178 = por %p176, %p177
    %p180 = scmp.ne.s32.totalorder %s163, %s179
    %p181 = scmp.eq.s32.totalorder %s19, 0
    %p182 = por %p180, %p181
    %p183 = scmp.le.s32.totalorder 1, %s13
    %p184 = scmp.lt.s32.totalorder %s13, 3
    %p185 = pnand %p183, %p184
    %p186 = pneg %p185
    // Predicated region
    $region9: #{resblock_forward.5} parent=5 // pred_check
      _
    $region10: #{resblock_forward.5} parent=5 // pred_check_branch
      %188 = sbr.rel (%p185) target = $region12
    $region11: #{resblock_forward.5} parent=5 // pred_region
      %s189 = ssub.s32 %s13, 1
      // Predicated region
      $region13: #{resblock_forward.5} parent=11 // pred_check
        %p190 = pneg %p60
      $region14: #{resblock_forward.5} parent=11 // pred_check_branch
        %192 = sbr.rel (%p190) target = $region16
      $region15: #{resblock_forward.5} parent=11 // pred_region
        _
      $region16: #{resblock_forward.5} parent=11 // pred_fallthru
        _
      // Predicated region
      $region17: #{resblock_forward.5} parent=11 // pred_check
        %p193 = pneg %p81
      $region18: #{resblock_forward.5} parent=11 // pred_check_branch
        %195 = sbr.rel (%p193) target = $region20
      $region19: #{resblock_forward.5} parent=11 // pred_region
        _
      $region20: #{resblock_forward.5} parent=11 // pred_fallthru
        _
      // Predicated region
      $region21: #{resblock_forward.5} parent=11 // pred_check
        %p196 = pneg %p102
      $region22: #{resblock_forward.5} parent=11 // pred_check_branch
        %198 = sbr.rel (%p196) target = $region24
      $region23: #{resblock_forward.5} parent=11 // pred_region
        _
      $region24: #{resblock_forward.5} parent=11 // pred_fallthru
        _
      // Predicated region
      $region25: #{resblock_forward.5} parent=11 // pred_check
        %p199 = pneg %p123
      $region26: #{resblock_forward.5} parent=11 // pred_check_branch
        %201 = sbr.rel (%p199) target = $region28
      $region27: #{resblock_forward.5} parent=11 // pred_region
        _
      $region28: #{resblock_forward.5} parent=11 // pred_fallthru
        _
    $region12: #{resblock_forward.5} parent=5 // pred_fallthru
      _
    %p202 = scmp.lt.s32.totalorder %s13, 2
    // Predicated region
    $region29: #{resblock_forward.5} parent=5 // pred_check
      %p203 = pneg %p202
    $region30: #{resblock_forward.5} parent=5 // pred_check_branch
      %205 = sbr.rel (%p203) target = $region32
    $region31: #{resblock_forward.5} parent=5 // pred_region
      // Predicated region
      $region33: #{resblock_forward.5} parent=31 // pred_check
        %p206 = pneg %p33
      $region34: #{resblock_forward.5} parent=31 // pred_check_branch
        %208 = sbr.rel (%p206) target = $region36
      $region35: #{resblock_forward.5} parent=31 // pred_region
        %p209 = scmp.lt.s32.totalorder %s13, 1
        %s210 = scalar_select %p209, %s13, 1
        %s211 = smul.addr %s210, 4
        %s212 = smul.addr %s211, 8
        %s213 = scalar_lea.vmem %s0, %s212
      $region36: #{resblock_forward.5} parent=31 // pred_fallthru
        _
    $region32: #{resblock_forward.5} parent=5 // pred_fallthru
      _
    %p214 = scmp.le.s32.totalorder 1, %s13
    %p215 = scmp.lt.s32.totalorder %s13, 3
    %p216 = pnand %p214, %p215
    %p217 = pneg %p216
    // Predicated region
    $region37: #{resblock_forward.5} parent=5 // pred_check
      _
    $region38: #{resblock_forward.5} parent=5 // pred_check_branch
      %219 = sbr.rel (%p216) target = $region40
    $region39: #{resblock_forward.5} parent=5 // pred_region
      %s220 = ssub.s32 %s13, 1
      %p221 = scmp.lt.s32.totalorder %s18, 1
      %s222 = scalar_select %p221, %s18, 1
      %s223 = smul.addr %s222, 4
      %s224 = smul.addr %s223, 8
      %s225 = scalar_lea.vmem %s0, %s224
      %p226 = pneg %p39
      %p227 = pneg %p36
      %p228 = pneg %p60
      %p229 = pneg %p57
      %p230 = pneg %p81
      %p231 = pneg %p78
      %p232 = pneg %p102
      %p233 = pneg %p99
      %p234 = pneg %p123
      %p235 = pneg %p120
      %p236 = pneg %p149
      %p237 = pneg %p146
      %p238 = scmp.lt.s32.totalorder %s18, 1
      %s239 = scalar_select %p238, %s18, 1
      %s240 = smul.addr %s239, 4
      %s241 = smul.addr %s240, 8
      %s242 = scalar_lea.vmem %s5, %s241
      %p243 = pneg %p175
      %p244 = pneg %p172
      %p245 = scmp.lt.s32.totalorder %s18, 1
      %s246 = scalar_select %p245, %s18, 1
      %s247 = smul.addr %s246, 2
      %s248 = smul.addr %s247, 8
      %s249 = scalar_lea.vmem %s6, %s248
      %p250 = scmp.lt.s32.totalorder %s18, 1
      %s251 = scalar_select %p250, %s18, 1
      %s252 = smul.addr %s251, 4
      %s253 = smul.addr %s252, 8
      %s254 = scalar_lea.vmem %s0, %s253
      %p255 = scmp.lt.s32.totalorder %s18, 1
      %s256 = scalar_select %p255, %s18, 1
      %s257 = smul.addr %s256, 4
      %s258 = smul.addr %s257, 8
      %s259 = scalar_lea.vmem %s5, %s258
      %p260 = scmp.lt.s32.totalorder %s18, 1
      %s261 = scalar_select %p260, %s18, 1
      %s262 = smul.addr %s261, 2
      %s263 = smul.addr %s262, 8
      %s264 = scalar_lea.vmem %s6, %s263
      %v265 = vld [vmem:[%s254] sm:$0xff]
      %v266 = vld [vmem:[%s254 + $0x8] sm:$0xff]
      %v267 = vld [vmem:[%s254 + $0x10] sm:$0xff]
      %v268 = vld [vmem:[%s254 + $0x18] sm:$0xff]
      %v269 = vld [vmem:[%s1] sm:$0xff]
      %v270 = vld [vmem:[%s1 + $0x8] sm:$0xff]
      %272 = vset.pattern.permute.xlu0 0
      %273 = vperm.xlu0 %272, %v269
      %v274 = vpop.permute.xlu0 %273
      %277 = vset.pattern.permute.xlu0 0
      %278 = vperm.xlu0 %277, %v270
      %v279 = vpop.permute.xlu0 %278
      %v281 = vmul.f32 %v265, %v274
      %v282 = vmul.f32 %v266, %v274
      %v283 = vmul.f32 %v267, %v279
      %v284 = vmul.f32 %v268, %v279
      %v285 = vld [vmem:[%s2] sm:$0xff]
      %v286 = vld [vmem:[%s2 + $0x8] sm:$0xff]
      %288 = vset.pattern.permute.xlu0 0
      %289 = vperm.xlu0 %288, %v285
      %v290 = vpop.permute.xlu0 %289
      %293 = vset.pattern.permute.xlu0 0
      %294 = vperm.xlu0 %293, %v286
      %v295 = vpop.permute.xlu0 %294
      %v297 = vadd.f32 %v281, %v290
      %v298 = vadd.f32 %v282, %v290
      %v299 = vadd.f32 %v283, %v295
      %v300 = vadd.f32 %v284, %v295
      %v301 = vmax.f32 %v297, 0.0
      %v302 = vmax.f32 %v298, 0.0
      %v303 = vmax.f32 %v299, 0.0
      %v304 = vmax.f32 %v300, 0.0
      %v305 = vld [vmem:[%s4] sm:$0xff]
      %v306 = vld [vmem:[%s4 + $0x8] sm:$0xff]
      %v307 = vld [vmem:[%s4 + $0x10] sm:$0x1]
      %v308 = vld [vmem:[%s4 + $0x18] sm:$0x1]
      %v309 = vld [vmem:[%s3] sm:$0xff]
      %v310 = vld [vmem:[%s3 + $0x8] sm:$0xff]
      %v311 = vld [vmem:[%s3 + $0x10] sm:$0xff]
      %v312 = vld [vmem:[%s3 + $0x18] sm:$0xff]
      %313 = vrot.lane.b32.xlu0 %v301, 17
      %v314 = vpop.permute.xlu0 %313
      %315 = vrot.lane.b32.xlu0 %v303, 17
      %v316 = vpop.permute.xlu0 %315
      %317 = vrot.lane.b32.xlu0 %v302, 17
      %v318 = vpop.permute.xlu0 %317
      %319 = vrot.lane.b32.xlu0 %v304, 17
      %v320 = vpop.permute.xlu0 %319
      %v321 = vlaneseq
      %v322 = vand.u32 %v321, 127
      %vm323 = vcmp.lt.s32.totalorder %v322, 17
      %v324 = vsel %vm323, %v314, %v318
      %v325 = vsel %vm323, %v316, %v320
      %v326 = vsel %vm323, %v318, %v314
      %v327 = vsel %vm323, %v320, %v316
      %v328 = vlaneseq
      %v329 = vshrl.u32 %v328, 7
      %v330 = vsub.s32 0, %v329
      %v331 = vrot.slane %v305, %v330
      %v332 = vlaneseq
      %v333 = vshrl.u32 %v332, 7
      %v334 = vsub.s32 0, %v333
      %v335 = vrot.slane %v306, %v334
      %v336 = vmul.f32 %v326, %v331
      %v337 = vmul.f32 %v324, %v335
      %v338 = vmul.f32 %v327, %v331
      %v339 = vmul.f32 %v325, %v335
      %340 = vrot.lane.b32.xlu0 %v301, 16
      %v341 = vpop.permute.xlu0 %340
      %342 = vrot.lane.b32.xlu0 %v303, 16
      %v343 = vpop.permute.xlu0 %342
      %344 = vrot.lane.b32.xlu0 %v302, 16
      %v345 = vpop.permute.xlu0 %344
      %346 = vrot.lane.b32.xlu0 %v304, 16
      %v347 = vpop.permute.xlu0 %346
      %vm348 = vcmp.lt.s32.totalorder %v322, 16
      %v349 = vsel %vm348, %v341, %v345
      %v350 = vsel %vm348, %v343, %v347
      %v351 = vsel %vm348, %v345, %v341
      %v352 = vsel %vm348, %v347, %v343
      %v353 = vlaneseq
      %v354 = vshrl.u32 %v353, 7
      %v355 = vsub.s32 1, %v354
      %v356 = vrot.slane %v305, %v355
      %v357 = vlaneseq
      %v358 = vshrl.u32 %v357, 7
      %v359 = vsub.s32 1, %v358
      %v360 = vrot.slane %v306, %v359
      %v361 = vmul.f32 %v351, %v356
      %v362 = vmul.f32 %v349, %v360
      %v363 = vmul.f32 %v352, %v356
      %v364 = vmul.f32 %v350, %v360
      %365 = vrot.lane.b32.xlu0 %v301, 15
      %v366 = vpop.permute.xlu0 %365
      %367 = vrot.lane.b32.xlu0 %v303, 15
      %v368 = vpop.permute.xlu0 %367
      %369 = vrot.lane.b32.xlu0 %v302, 15
      %v370 = vpop.permute.xlu0 %369
      %371 = vrot.lane.b32.xlu0 %v304, 15
      %v372 = vpop.permute.xlu0 %371
      %vm373 = vcmp.lt.s32.totalorder %v322, 15
      %v374 = vsel %vm373, %v366, %v370
      %v375 = vsel %vm373, %v368, %v372
      %v376 = vsel %vm373, %v370, %v366
      %v377 = vsel %vm373, %v372, %v368
      %v378 = vlaneseq
      %v379 = vshrl.u32 %v378, 7
      %v380 = vsub.s32 2, %v379
      %v381 = vrot.slane %v305, %v380
      %v382 = vlaneseq
      %v383 = vshrl.u32 %v382, 7
      %v384 = vsub.s32 2, %v383
      %v385 = vrot.slane %v306, %v384
      %v386 = vmul.f32 %v376, %v381
      %v387 = vmul.f32 %v374, %v385
      %v388 = vmul.f32 %v377, %v381
      %v389 = vmul.f32 %v375, %v385
      %390 = vrot.lane.b32.xlu0 %v301, 1
      %v391 = vpop.permute.xlu0 %390
      %392 = vrot.lane.b32.xlu0 %v303, 1
      %v393 = vpop.permute.xlu0 %392
      %394 = vrot.lane.b32.xlu0 %v302, 1
      %v395 = vpop.permute.xlu0 %394
      %396 = vrot.lane.b32.xlu0 %v304, 1
      %v397 = vpop.permute.xlu0 %396
      %vm398 = vcmp.lt.s32.totalorder %v322, 1
      %v399 = vsel %vm398, %v391, %v395
      %v400 = vsel %vm398, %v393, %v397
      %v401 = vsel %vm398, %v395, %v391
      %v402 = vsel %vm398, %v397, %v393
      %v403 = vlaneseq
      %v404 = vshrl.u32 %v403, 7
      %v405 = vsub.s32 3, %v404
      %v406 = vrot.slane %v305, %v405
      %v407 = vlaneseq
      %v408 = vshrl.u32 %v407, 7
      %v409 = vsub.s32 3, %v408
      %v410 = vrot.slane %v306, %v409
      %v411 = vmul.f32 %v401, %v406
      %v412 = vmul.f32 %v399, %v410
      %v413 = vmul.f32 %v402, %v406
      %v414 = vmul.f32 %v400, %v410
      %415 = vrot.lane.b32.xlu0 %v301, 127
      %v416 = vpop.permute.xlu0 %415
      %417 = vrot.lane.b32.xlu0 %v303, 127
      %v418 = vpop.permute.xlu0 %417
      %419 = vrot.lane.b32.xlu0 %v302, 127
      %v420 = vpop.permute.xlu0 %419
      %421 = vrot.lane.b32.xlu0 %v304, 127
      %v422 = vpop.permute.xlu0 %421
      %vm423 = vcmp.lt.s32.totalorder %v322, 127
      %v424 = vsel %vm423, %v416, %v420
      %v425 = vsel %vm423, %v418, %v422
      %v426 = vsel %vm423, %v420, %v416
      %v427 = vsel %vm423, %v422, %v418
      %v428 = vlaneseq
      %v429 = vshrl.u32 %v428, 7
      %v430 = vsub.s32 5, %v429
      %v431 = vrot.slane %v305, %v430
      %v432 = vlaneseq
      %v433 = vshrl.u32 %v432, 7
      %v434 = vsub.s32 5, %v433
      %v435 = vrot.slane %v306, %v434
      %v436 = vmul.f32 %v424, %v431
      %v437 = vmul.f32 %v426, %v435
      %v438 = vmul.f32 %v425, %v431
      %v439 = vmul.f32 %v427, %v435
      %440 = vrot.lane.b32.xlu0 %v301, 113
      %v441 = vpop.permute.xlu0 %440
      %442 = vrot.lane.b32.xlu0 %v303, 113
      %v443 = vpop.permute.xlu0 %442
      %444 = vrot.lane.b32.xlu0 %v302, 113
      %v445 = vpop.permute.xlu0 %444
      %446 = vrot.lane.b32.xlu0 %v304, 113
      %v447 = vpop.permute.xlu0 %446
      %vm448 = vcmp.lt.s32.totalorder %v322, 113
      %v449 = vsel %vm448, %v441, %v445
      %v450 = vsel %vm448, %v443, %v447
      %v451 = vsel %vm448, %v445, %v441
      %v452 = vsel %vm448, %v447, %v443
      %v453 = vlaneseq
      %v454 = vshrl.u32 %v453, 7
      %v455 = vsub.s32 6, %v454
      %v456 = vrot.slane %v305, %v455
      %v457 = vlaneseq
      %v458 = vshrl.u32 %v457, 7
      %v459 = vsub.s32 6, %v458
      %v460 = vrot.slane %v306, %v459
      %v461 = vmul.f32 %v449, %v456
      %v462 = vmul.f32 %v451, %v460
      %v463 = vmul.f32 %v450, %v456
      %v464 = vmul.f32 %v452, %v460
      %465 = vrot.lane.b32.xlu0 %v301, 112
      %v466 = vpop.permute.xlu0 %465
      %467 = vrot.lane.b32.xlu0 %v303, 112
      %v468 = vpop.permute.xlu0 %467
      %469 = vrot.lane.b32.xlu0 %v302, 112
      %v470 = vpop.permute.xlu0 %469
      %471 = vrot.lane.b32.xlu0 %v304, 112
      %v472 = vpop.permute.xlu0 %471
      %vm473 = vcmp.lt.s32.totalorder %v322, 112
      %v474 = vsel %vm473, %v466, %v470
      %v475 = vsel %vm473, %v468, %v472
      %v476 = vsel %vm473, %v470, %v466
      %v477 = vsel %vm473, %v472, %v468
      %v478 = vlaneseq
      %v479 = vshrl.u32 %v478, 7
      %v480 = vsub.s32 7, %v479
      %v481 = vrot.slane %v305, %v480
      %v482 = vlaneseq
      %v483 = vshrl.u32 %v482, 7
      %v484 = vsub.s32 7, %v483
      %v485 = vrot.slane %v306, %v484
      %v486 = vmul.f32 %v474, %v481
      %v487 = vmul.f32 %v476, %v485
      %v488 = vmul.f32 %v475, %v481
      %v489 = vmul.f32 %v477, %v485
      %490 = vrot.lane.b32.xlu0 %v301, 111
      %v491 = vpop.permute.xlu0 %490
      %492 = vrot.lane.b32.xlu0 %v303, 111
      %v493 = vpop.permute.xlu0 %492
      %494 = vrot.lane.b32.xlu0 %v302, 111
      %v495 = vpop.permute.xlu0 %494
      %496 = vrot.lane.b32.xlu0 %v304, 111
      %v497 = vpop.permute.xlu0 %496
      %vm498 = vcmp.lt.s32.totalorder %v322, 111
      %v499 = vsel %vm498, %v491, %v495
      %v500 = vsel %vm498, %v493, %v497
      %v501 = vsel %vm498, %v495, %v491
      %v502 = vsel %vm498, %v497, %v493
      %v503 = vlaneseq
      %v504 = vshrl.u32 %v503, 7
      %v505 = vsub.s32 0, %v504
      %v506 = vrot.slane %v307, %v505
      %v507 = vlaneseq
      %v508 = vshrl.u32 %v507, 7
      %v509 = vsub.s32 0, %v508
      %v510 = vrot.slane %v308, %v509
      %v511 = vmul.f32 %v499, %v506
      %v512 = vmul.f32 %v501, %v510
      %v513 = vmul.f32 %v500, %v506
      %v514 = vmul.f32 %v502, %v510
      %vm515 = vcmask 130048
      %v517 = vsel %vm515, %v310, 0
      %v520 = vsel %vm515, %v312, 0
      %522 = vmatprep.subr.mxu0 %v337
      %523 = vmatpush1.msra.mxu0 %v336
      %524 = vmatprep.subr.mxu0 %v339
      %525 = vmatpush1.msra.mxu0 %v338
      %526 = vmatprep.subr.mxu0 %v362
      %527 = vmatpush1.msra.mxu0 %v361
      %528 = vmatprep.subr.mxu0 %v364
      %529 = vmatpush1.msra.mxu0 %v363
      %530 = vmatprep.subr.mxu0 %v387
      %531 = vmatpush1.msra.mxu0 %v386
      %532 = vmatprep.subr.mxu0 %v389
      %533 = vmatpush1.msra.mxu0 %v388
      %534 = vmatprep.subr.mxu0 %v412
      %535 = vmatpush1.msra.mxu0 %v411
      %536 = vmatprep.subr.mxu0 %v414
      %537 = vmatpush1.msra.mxu0 %v413
      %538 = vmatprep.subr.mxu0 %v302
      %539 = vmatpush1.msra.mxu0 %v301
      %540 = vmatprep.subr.mxu0 %v304
      %541 = vmatpush1.msra.mxu0 %v303
      %542 = vmatprep.subr.mxu0 %v437
      %543 = vmatpush1.msra.mxu0 %v436
      %544 = vmatprep.subr.mxu0 %v439
      %545 = vmatpush1.msra.mxu0 %v438
      %546 = vmatprep.subr.mxu0 %v462
      %547 = vmatpush1.msra.mxu0 %v461
      %548 = vmatprep.subr.mxu0 %v464
      %549 = vmatpush1.msra.mxu0 %v463
      %550 = vmatprep.subr.mxu0 %v487
      %551 = vmatpush1.msra.mxu0 %v486
      %552 = vmatprep.subr.mxu0 %v489
      %553 = vmatpush1.msra.mxu0 %v488
      %554 = vmatprep.subr.mxu0 %v512
      %555 = vmatpush1.msra.mxu0 %v511
      %556 = vmatprep.subr.mxu0 %v514
      %557 = vmatpush1.msra.mxu0 %v513
      %558 = vmatprep.subr.mxu0 0.0
      %559 = vmatpush1.msra.mxu0 0.0
      %560 = vmatprep.subr.mxu0 0.0
      %561 = vmatpush1.msra.mxu0 0.0
      %562 = vmatprep.subr.mxu0 0.0
      %563 = vmatpush1.msra.mxu0 0.0
      %564 = vmatprep.subr.mxu0 0.0
      %565 = vmatpush1.msra.mxu0 0.0
      %566 = vmatprep.subr.mxu0 0.0
      %567 = vmatpush1.msra.mxu0 0.0
      %568 = vmatprep.subr.mxu0 0.0
      %569 = vmatpush1.msra.mxu0 0.0
      %570 = vmatprep.subr.mxu0 0.0
      %571 = vmatpush1.msra.mxu0 0.0
      %572 = vmatprep.subr.mxu0 0.0
      %573 = vmatpush1.msra.mxu0 0.0
      %574 = vmatprep.subr.mxu0 0.0
      %575 = vmatpush1.msra.mxu0 0.0
      %576 = vmatprep.subr.mxu0 0.0
      %577 = vmatpush1.msra.mxu0 0.0
      %578 = vmatprep.subr.mxu0 0.0
      %579 = vmatpush1.msra.mxu0 0.0
      %580 = vmatprep.subr.mxu0 0.0
      %581 = vmatpush1.msra.mxu0 0.0
      %582 = vmatprep.subr.mxu0 0.0
      %583 = vmatpush1.msra.mxu0 0.0
      %584 = vmatprep.subr.mxu0 0.0
      %585 = vmatpush1.msra.mxu0 0.0
      %586 = vmatprep.mubr.f32.mxu0 %v517
      %587 = vmatmul.mubr.f32.gmra.mrb[0].mxu0 %v309
      %v588 = vpop.f32.mrb[0].mxu0
      %v589 = vadd.f32 0.0, %v588
      %v590 = vpop.f32.mrb[0].mxu0
      %v591 = vadd.f32 0.0, %v590
      %592 = vmatprep.mubr.f32.mxu0 %v520
      %593 = vmatmul.mubr.f32.gmra.mrb[0].mxu0 %v311
      %v594 = vpop.f32.mrb[0].mxu0
      %v595 = vadd.f32 0.0, %v594
      %v596 = vpop.f32.mrb[0].mxu0
      %v597 = vadd.f32 0.0, %v596
      %598 = vdwg.mxu0
      %599 = vst [vmem:[%s259] sm:$0xff] %v589
      %600 = vst [vmem:[%s259 + $0x8] sm:$0xff] %v591
      %601 = vst [vmem:[%s259 + $0x10] sm:$0xff] %v595
      %602 = vst [vmem:[%s259 + $0x18] sm:$0xff] %v597
      %v603 = vadd.f32 %v589, %v591
      %604 = vadd.xlane.f32.xlu0 %v603
      %v605 = vpop.xlane.xlu0 %604
      %v606 = vadd.f32 %v595, %v597
      %607 = vadd.xlane.f32.xlu0 %v606
      %v608 = vpop.xlane.xlu0 %607
      %v609 = vmul.f32 %v589, %v589
      %v610 = vmul.f32 %v591, %v591
      %v611 = vmul.f32 %v595, %v595
      %v612 = vmul.f32 %v597, %v597
      %v613 = vadd.f32 %v609, %v610
      %614 = vadd.xlane.f32.xlu0 %v613
      %v615 = vpop.xlane.xlu0 %614
      %v616 = vadd.f32 %v611, %v612
      %617 = vadd.xlane.f32.xlu0 %v616
      %v618 = vpop.xlane.xlu0 %617
      %vm619 = vcmask 7168
      %v620 = vsel %vm619, %v605, %v615
      %v621 = vsel %vm619, %v608, %v618
      %vm622 = vcmask 15360
      %623 = vst.msk [vmem:[%s264] sm:$0xff] %vm622, %v620
      %624 = vst.msk [vmem:[%s264 + $0x8] sm:$0xff] %vm622, %v621
      %p625 = scmp.lt.s32.totalorder %s18, 1
      %s626 = scalar_select %p625, %s18, 1
      %s627 = smul.addr %s626, 4
      %s628 = smul.addr %s627, 8
      %s629 = scalar_lea.vmem %s5, %s628
      %p630 = scmp.lt.s32.totalorder %s18, 1
      %s631 = scalar_select %p630, %s18, 1
      %s632 = smul.addr %s631, 2
      %s633 = smul.addr %s632, 8
      %s634 = scalar_lea.vmem %s6, %s633
      // Predicated region
      $region41: #{resblock_forward.5} parent=39 // pred_check
        %p635 = pneg %p146
      $region42: #{resblock_forward.5} parent=39 // pred_check_branch
        %637 = sbr.rel (%p635) target = $region44
      $region43: #{resblock_forward.5} parent=39 // pred_region
        _
      $region44: #{resblock_forward.5} parent=39 // pred_fallthru
        _
      // Predicated region
      $region45: #{resblock_forward.5} parent=39 // pred_check
        %p638 = pneg %p172
      $region46: #{resblock_forward.5} parent=39 // pred_check_branch
        %640 = sbr.rel (%p638) target = $region48
      $region47: #{resblock_forward.5} parent=39 // pred_region
        _
      $region48: #{resblock_forward.5} parent=39 // pred_fallthru
        _
    $region40: #{resblock_forward.5} parent=5 // pred_fallthru
      _
    %p641 = scmp.le.s32.totalorder 2, %s13
    // Predicated region
    $region49: #{resblock_forward.5} parent=5 // pred_check
      %p642 = pneg %p641
    $region50: #{resblock_forward.5} parent=5 // pred_check_branch
      %644 = sbr.rel (%p642) target = $region52
    $region51: #{resblock_forward.5} parent=5 // pred_region
      %s645 = ssub.s32 %s13, 2
      // Predicated region
      $region53: #{resblock_forward.5} parent=51 // pred_check
        %p646 = pneg %p152
      $region54: #{resblock_forward.5} parent=51 // pred_check_branch
        %648 = sbr.rel (%p646) target = $region56
      $region55: #{resblock_forward.5} parent=51 // pred_region
        %p649 = scmp.lt.s32.totalorder %s19, 1
        %s650 = scalar_select %p649, %s19, 1
        %s651 = smul.addr %s650, 4
        %s652 = smul.addr %s651, 8
        %s653 = scalar_lea.vmem %s5, %s652
      $region56: #{resblock_forward.5} parent=51 // pred_fallthru
        _
      // Predicated region
      $region57: #{resblock_forward.5} parent=51 // pred_check
        %p654 = pneg %p178
      $region58: #{resblock_forward.5} parent=51 // pred_check_branch
        %656 = sbr.rel (%p654) target = $region60
      $region59: #{resblock_forward.5} parent=51 // pred_region
        %p657 = scmp.lt.s32.totalorder %s19, 1
        %s658 = scalar_select %p657, %s19, 1
        %s659 = smul.addr %s658, 2
        %s660 = smul.addr %s659, 8
        %s661 = scalar_lea.vmem %s6, %s660
      $region60: #{resblock_forward.5} parent=51 // pred_fallthru
        _
    $region52: #{resblock_forward.5} parent=5 // pred_fallthru
      _
  $region6: #{resblock_forward.5} parent=0 // loop_footer
    %s17 = sadd.s32 1, %s13
  $region7: #{resblock_forward.5} parent=0 // loop_footer_branch
    %12 = sbr.rel target = $region3
  $region8: #{resblock_forward.5} parent=0 // loop_exit
    _

// kernel: resblock_forward.6
$region0: #{resblock_forward.6}
  #allocation0 [shape = 'u32[]', space=smem, size = 0x4, offset = 0x4, fixed_abs, tag = 'smem constant byte address 0x4 - core index']
  #allocation1 [shape = 'u32[144,128]{1,0:T(1,128)}', space=vmem, size = 0x12000, scoped, tag = 'internal scratch']
  %s0 = inlined_call_operand.vmem [shape: f32[2,16,256], index: 0, kind: input, shape index: {}]
  %s1 = inlined_call_operand.vmem [shape: f32[16,1], index: 1, kind: input, shape index: {}]
  %s2 = inlined_call_operand.vmem [shape: f32[16,1], index: 2, kind: input, shape index: {}]
  %s3 = inlined_call_operand.vmem [shape: f32[32,16], index: 3, kind: input, shape index: {}]
  %s4 = inlined_call_operand.vmem [shape: f32[2,32,256], index: 4, kind: output, shape index: {0}]
  %s5 = inlined_call_operand.vmem [shape: f32[2,32,2], index: 5, kind: output, shape index: {1}]
  %6 = xla_tuple %s4, %s5
  %s7 = sld [smem:[#allocation0]]
  $region65: #{resblock_forward.6} parent=0
    _
  %s9 = ssub.s32 1, %s7
  %s10 = scalar_select 0, %s9, %s7
  loop: start=0, step=1, limit=4
  $region2: #{resblock_forward.6} parent=0 // loop_pre_header
    _
  $region3: #{resblock_forward.6} parent=0 // loop_header
    %s12 = sphi 0, %s16
    %p13 = scmp.ge.s32.totalorder %s12, 4
    %s19 = sphi 0, %s31
    %s20 = sphi 0, %s27
    %s21 = sphi 0, %s19
    %s22 = sphi 0, %s20
    %s23 = sphi 0, %s21
    %s24 = sphi 0, %s22
    %s36 = sphi 0, %s38
    %s39 = sphi 0, %s36
    %s40 = sphi 0, %s39
    %s56 = sphi 0, %s40
    %s60 = sphi 0, %s60
    %s62 = sphi 0, %s60
    %s63 = sphi 0, %s62
    %s77 = sphi 0, %s63
    %s81 = sphi 0, %s81
    %s83 = sphi 0, %s81
    %s84 = sphi 0, %s83
    %s98 = sphi 0, %s84
    %s102 = sphi 0, %s102
    %s104 = sphi 0, %s102
    %s105 = sphi 0, %s104
    %s119 = sphi 0, %s105
    %s127 = sphi 0, %s129
    %s130 = sphi 0, %s127
    %s131 = sphi 0, %s130
    %s147 = sphi 0, %s131
    %s153 = sphi 0, %s155
    %s156 = sphi 0, %s153
    %s157 = sphi 0, %s156
    %s173 = sphi 0, %s157
  $region4: #{resblock_forward.6} parent=0 // loop_header_branch
    %15 = sbr.rel (%p13) target = $region8
  $region5: #{resblock_forward.6} parent=0 // loop_body
    %s17 = ssub.s32 %s12, 1
    %s18 = ssub.s32 %s12, 2
    %s25 = sadd.s32 1, %s20
    %p26 = scmp.ge.s32.totalorder %s25, 1
    %s27 = scalar_select %p26, 0, %s25
    %s28 = sadd.s32 1, %s19
    %s29 = scalar_select %p26, %s28, %s19
    %p30 = scmp.ge.s32.totalorder %s29, 2
    %s31 = scalar_select %p30, 0, %s29
    %s32 = ssub.s32 %s19, %s31
    %s33 = ssub.s32 %s20, %s27
    %s34 = sor.u32 %s32, %s33
    %p35 = scmp.eq.s32.totalorder %s34, 0
    %s37 = sadd.s32 %s36, 1
    %s38 = scalar_select %p35, %s36, %s37
    %p41 = pneg %p35
    %p42 = scmp.eq.s32.totalorder %s12, 1
    %p43 = por %p41, %p42
    %p44 = scmp.ne.s32.totalorder %s36, %s39
    %p45 = scmp.eq.s32.totalorder %s12, 0
    %p46 = por %p44, %p45
    %p47 = scmp.ne.s32.totalorder %s36, %s39
    %p48 = scmp.eq.s32.totalorder %s17, 1
    %p49 = por %p47, %p48
    %p50 = scmp.ne.s32.totalorder %s39, %s40
    %p51 = scmp.eq.s32.totalorder %s17, 0
    %p52 = por %p50, %p51
    %p53 = scmp.ne.s32.totalorder %s39, %s40
    %p54 = scmp.eq.s32.totalorder %s18, 1
    %p55 = por %p53, %p54
    %p57 = scmp.ne.s32.totalorder %s40, %s56
    %p58 = scmp.eq.s32.totalorder %s18, 0
    %p59 = por %p57, %p58
    %s61 = sadd.s32 %s60, 1
    %p64 = scmp.eq.s32.totalorder %s12, 1
    %p65 = scmp.ne.s32.totalorder %s60, %s62
    %p66 = scmp.eq.s32.totalorder %s12, 0
    %p67 = por %p65, %p66
    %p68 = scmp.ne.s32.totalorder %s60, %s62
    %p69 = scmp.eq.s32.totalorder %s17, 1
    %p70 = por %p68, %p69
    %p71 = scmp.ne.s32.totalorder %s62, %s63
    %p72 = scmp.eq.s32.totalorder %s17, 0
    %p73 = por %p71, %p72
    %p74 = scmp.ne.s32.totalorder %s62, %s63
    %p75 = scmp.eq.s32.totalorder %s18, 1
    %p76 = por %p74, %p75
    %p78 = scmp.ne.s32.totalorder %s63, %s77
    %p79 = scmp.eq.s32.totalorder %s18, 0
    %p80 = por %p78, %p79
    %s82 = sadd.s32 %s81, 1
    %p85 = scmp.eq.s32.totalorder %s12, 1
    %p86 = scmp.ne.s32.totalorder %s81, %s83
    %p87 = scmp.eq.s32.totalorder %s12, 0
    %p88 = por %p86, %p87
    %p89 = scmp.ne.s32.totalorder %s81, %s83
    %p90 = scmp.eq.s32.totalorder %s17, 1
    %p91 = por %p89, %p90
    %p92 = scmp.ne.s32.totalorder %s83, %s84
    %p93 = scmp.eq.s32.totalorder %s17, 0
    %p94 = por %p92, %p93
    %p95 = scmp.ne.s32.totalorder %s83, %s84
    %p96 = scmp.eq.s32.totalorder %s18, 1
    %p97 = por %p95, %p96
    %p99 = scmp.ne.s32.totalorder %s84, %s98
    %p100 = scmp.eq.s32.totalorder %s18, 0
    %p101 = por %p99, %p100
    %s103 = sadd.s32 %s102, 1
    %p106 = scmp.eq.s32.totalorder %s12, 1
    %p107 = scmp.ne.s32.totalorder %s102, %s104
    %p108 = scmp.eq.s32.totalorder %s12, 0
    %p109 = por %p107, %p108
    %p110 = scmp.ne.s32.totalorder %s102, %s104
    %p111 = scmp.eq.s32.totalorder %s17, 1
    %p112 = por %p110, %p111
    %p113 = scmp.ne.s32.totalorder %s104, %s105
    %p114 = scmp.eq.s32.totalorder %s17, 0
    %p115 = por %p113, %p114
    %p116 = scmp.ne.s32.totalorder %s104, %s105
    %p117 = scmp.eq.s32.totalorder %s18, 1
    %p118 = por %p116, %p117
    %p120 = scmp.ne.s32.totalorder %s105, %s119
    %p121 = scmp.eq.s32.totalorder %s18, 0
    %p122 = por %p120, %p121
    %s123 = ssub.s32 %s19, %s31
    %s124 = ssub.s32 %s20, %s27
    %s125 = sor.u32 %s123, %s124
    %p126 = scmp.eq.s32.totalorder %s125, 0
    %s128 = sadd.s32 %s127, 1
    %s129 = scalar_select %p126, %s127, %s128
    %p132 = pneg %p126
    %p133 = scmp.eq.s32.totalorder %s12, 1
    %p134 = por %p132, %p133
    %p135 = scmp.ne.s32.totalorder %s127, %s130
    %p136 = scmp.eq.s32.totalorder %s12, 0
    %p137 = por %p135, %p136
    %p138 = scmp.ne.s32.totalorder %s127, %s130
    %p139 = scmp.eq.s32.totalorder %s17, 1
    %p140 = por %p138, %p139
    %p141 = scmp.ne.s32.totalorder %s130, %s131
    %p142 = scmp.eq.s32.totalorder %s17, 0
    %p143 = por %p141, %p142
    %p144 = scmp.ne.s32.totalorder %s130, %s131
    %p145 = scmp.eq.s32.totalorder %s18, 1
    %p146 = por %p144, %p145
    %p148 = scmp.ne.s32.totalorder %s131, %s147
    %p149 = scmp.eq.s32.totalorder %s18, 0
    %p150 = por %p148, %p149
    %s151 = ssub.s32 %s19, %s31
    %p152 = scmp.eq.s32.totalorder %s151, 0
    %s154 = sadd.s32 %s153, 1
    %s155 = scalar_select %p152, %s153, %s154
    %p158 = pneg %p152
    %p159 = scmp.eq.s32.totalorder %s12, 1
    %p160 = por %p158, %p159
    %p161 = scmp.ne.s32.totalorder %s153, %s156
    %p162 = scmp.eq.s32.totalorder %s12, 0
    %p163 = por %p161, %p162
    %p164 = scmp.ne.s32.totalorder %s153, %s156
    %p165 = scmp.eq.s32.totalorder %s17, 1
    %p166 = por %p164, %p165
    %p167 = scmp.ne.s32.totalorder %s156, %s157
    %p168 = scmp.eq.s32.totalorder %s17, 0
    %p169 = por %p167, %p168
    %p170 = scmp.ne.s32.totalorder %s156, %s157
    %p171 = scmp.eq.s32.totalorder %s18, 1
    %p172 = por %p170, %p171
    %p174 = scmp.ne.s32.totalorder %s157, %s173
    %p175 = scmp.eq.s32.totalorder %s18, 0
    %p176 = por %p174, %p175
    %p177 = scmp.le.s32.totalorder 1, %s12
    %p178 = scmp.lt.s32.totalorder %s12, 3
    %p179 = pnand %p177, %p178
    %p180 = pneg %p179
    // Predicated region
    $region9: #{resblock_forward.6} parent=5 // pred_check
      _
    $region10: #{resblock_forward.6} parent=5 // pred_check_branch
      %182 = sbr.rel (%p179) target = $region12
    $region11: #{resblock_forward.6} parent=5 // pred_region
      %s183 = ssub.s32 %s12, 1
      // Predicated region
      $region13: #{resblock_forward.6} parent=11 // pred_check
        %p184 = pneg %p73
      $region14: #{resblock_forward.6} parent=11 // pred_check_branch
        %186 = sbr.rel (%p184) target = $region16
      $region15: #{resblock_forward.6} parent=11 // pred_region
        _
      $region16: #{resblock_forward.6} parent=11 // pred_fallthru
        _
      // Predicated region
      $region17: #{resblock_forward.6} parent=11 // pred_check
        %p187 = pneg %p94
      $region18: #{resblock_forward.6} parent=11 // pred_check_branch
        %189 = sbr.rel (%p187) target = $region20
      $region19: #{resblock_forward.6} parent=11 // pred_region
        _
      $region20: #{resblock_forward.6} parent=11 // pred_fallthru
        _
      // Predicated region
      $region21: #{resblock_forward.6} parent=11 // pred_check
        %p190 = pneg %p115
      $region22: #{resblock_forward.6} parent=11 // pred_check_branch
        %192 = sbr.rel (%p190) target = $region24
      $region23: #{resblock_forward.6} parent=11 // pred_region
        _
      $region24: #{resblock_forward.6} parent=11 // pred_fallthru
        _
    $region12: #{resblock_forward.6} parent=5 // pred_fallthru
      _
    %p193 = scmp.lt.s32.totalorder %s12, 2
    // Predicated region
    $region25: #{resblock_forward.6} parent=5 // pred_check
      %p194 = pneg %p193
    $region26: #{resblock_forward.6} parent=5 // pred_check_branch
      %196 = sbr.rel (%p194) target = $region28
    $region27: #{resblock_forward.6} parent=5 // pred_region
      // Predicated region
      $region29: #{resblock_forward.6} parent=27 // pred_check
        %p197 = pneg %p46
      $region30: #{resblock_forward.6} parent=27 // pred_check_branch
        %199 = sbr.rel (%p197) target = $region32
      $region31: #{resblock_forward.6} parent=27 // pred_region
        %s200 = smul.u32 2, %s20
        %p201 = scmp.lt.s32.totalorder %s19, 1
        %s202 = scalar_select %p201, %s19, 1
        %p203 = scmp.lt.s32.totalorder %s200, 1
        %s204 = scalar_select %p203, %s200, 1
        %s205 = smul.addr %s202, 4
        %s206 = sadd.s32 %s204, %s205
        %s207 = smul.addr %s206, 8
        %s208 = scalar_lea.vmem %s0, %s207
        %s209 = smul.u32 2, %s20
      $region32: #{resblock_forward.6} parent=27 // pred_fallthru
        _
    $region28: #{resblock_forward.6} parent=5 // pred_fallthru
      _
    %p210 = scmp.le.s32.totalorder 1, %s12
    %p211 = scmp.lt.s32.totalorder %s12, 3
    %p212 = pnand %p210, %p211
    %p213 = pneg %p212
    // Predicated region
    $region33: #{resblock_forward.6} parent=5 // pred_check
      _
    $region34: #{resblock_forward.6} parent=5 // pred_check_branch
      %215 = sbr.rel (%p212) target = $region36
    $region35: #{resblock_forward.6} parent=5 // pred_region
      %s216 = ssub.s32 %s12, 1
      %s217 = smul.u32 2, %s22
      %p218 = scmp.lt.s32.totalorder %s21, 1
      %s219 = scalar_select %p218, %s21, 1
      %p220 = scmp.lt.s32.totalorder %s217, 1
      %s221 = scalar_select %p220, %s217, 1
      %s222 = smul.addr %s219, 4
      %s223 = sadd.s32 %s221, %s222
      %s224 = smul.addr %s223, 8
      %s225 = scalar_lea.vmem %s0, %s224
      %p226 = pneg %p52
      %p227 = pneg %p49
      %p228 = pneg %p73
      %p229 = pneg %p70
      %p230 = pneg %p94
      %p231 = pneg %p91
      %p232 = pneg %p115
      %p233 = pneg %p112
      %p234 = pneg %p143
      %p235 = pneg %p140
      %s236 = smul.u32 2, %s22
      %p237 = scmp.lt.s32.totalorder %s21, 1
      %s238 = scalar_select %p237, %s21, 1
      %p239 = scmp.lt.s32.totalorder %s236, 1
      %s240 = scalar_select %p239, %s236, 1
      %s241 = smul.addr %s238, 8
      %s242 = sadd.s32 %s240, %s241
      %s243 = smul.addr %s242, 8
      %s244 = scalar_lea.vmem %s4, %s243
      %p245 = pneg %p169
      %p246 = pneg %p166
      %p247 = scmp.lt.s32.totalorder %s21, 1
      %s248 = scalar_select %p247, %s21, 1
      %s249 = smul.addr %s248, 4
      %s250 = smul.addr %s249, 8
      %s251 = scalar_lea.vmem %s5, %s250
      %s252 = smul.u32 2, %s22
      %p253 = scmp.lt.s32.totalorder %s21, 1
      %s254 = scalar_select %p253, %s21, 1
      %p255 = scmp.lt.s32.totalorder %s252, 1
      %s256 = scalar_select %p255, %s252, 1
      %s257 = smul.addr %s254, 4
      %s258 = sadd.s32 %s256, %s257
      %s259 = smul.addr %s258, 8
      %s260 = scalar_lea.vmem %s0, %s259
      %s261 = smul.u32 2, %s22
      %s262 = smul.u32 2, %s22
      %p263 = scmp.lt.s32.totalorder %s21, 1
      %s264 = scalar_select %p263, %s21, 1
      %p265 = scmp.lt.s32.totalorder %s262, 1
      %s266 = scalar_select %p265, %s262, 1
      %s267 = smul.addr %s264, 8
      %s268 = sadd.s32 %s266, %s267
      %s269 = smul.addr %s268, 8
      %s270 = scalar_lea.vmem %s4, %s269
      %s271 = smul.u32 2, %s22
      %p272 = scmp.lt.s32.totalorder %s21, 1
      %s273 = scalar_select %p272, %s21, 1
      %s274 = smul.addr %s273, 4
      %s275 = smul.addr %s274, 8
      %s276 = scalar_lea.vmem %s5, %s275
      %v277 = vld [vmem:[%s260] sm:$0xff]
      %v278 = vld [vmem:[%s260 + $0x8] sm:$0xff]
      %v279 = vld [vmem:[%s260 + $0x10] sm:$0xff]
      %v280 = vld [vmem:[%s260 + $0x18] sm:$0xff]
      %v281 = vld [vmem:[%s1] sm:$0xff]
      %v282 = vld [vmem:[%s1 + $0x8] sm:$0xff]
      %284 = vset.pattern.permute.xlu0 0
      %285 = vperm.xlu0 %284, %v281
      %v286 = vpop.permute.xlu0 %285
      %289 = vset.pattern.permute.xlu0 0
      %290 = vperm.xlu0 %289, %v282
      %v291 = vpop.permute.xlu0 %290
      %v293 = vmul.f32 %v277, %v286
      %v294 = vmul.f32 %v278, %v286
      %v295 = vmul.f32 %v279, %v291
      %v296 = vmul.f32 %v280, %v291
      %v297 = vld [vmem:[%s2] sm:$0xff]
      %v298 = vld [vmem:[%s2 + $0x8] sm:$0xff]
      %300 = vset.pattern.permute.xlu0 0
      %301 = vperm.xlu0 %300, %v297
      %v302 = vpop.permute.xlu0 %301
      %305 = vset.pattern.permute.xlu0 0
      %306 = vperm.xlu0 %305, %v298
      %v307 = vpop.permute.xlu0 %306
      %v309 = vadd.f32 %v293, %v302
      %v310 = vadd.f32 %v294, %v302
      %v311 = vadd.f32 %v295, %v307
      %v312 = vadd.f32 %v296, %v307
      %v313 = vmax.f32 %v309, 0.0
      %v314 = vmax.f32 %v310, 0.0
      %v315 = vmax.f32 %v311, 0.0
      %v316 = vmax.f32 %v312, 0.0
      %v317 = vld [vmem:[%s3] sm:$0xff]
      %v318 = vld [vmem:[%s3 + $0x8] sm:$0xff]
      %v319 = vld [vmem:[%s3 + $0x10] sm:$0xff]
      %v320 = vld [vmem:[%s3 + $0x18] sm:$0xff]
      %vm321 = vcmask 130048
      %v323 = vsel %vm321, %v317, 0
      %v326 = vsel %vm321, %v318, 0
      %v329 = vsel %vm321, %v319, 0
      %v332 = vsel %vm321, %v320, 0
      %334 = vmatprep.subr.mxu0 %v314
      %335 = vmatpush1.msra.mxu0 %v313
      %336 = vmatprep.subr.mxu0 %v316
      %337 = vmatpush1.msra.mxu0 %v315
      %338 = vmatprep.subr.mxu0 0.0
      %339 = vmatpush1.msra.mxu0 0.0
      %340 = vmatprep.subr.mxu0 0.0
      %341 = vmatpush1.msra.mxu0 0.0
      %342 = vmatprep.subr.mxu0 0.0
      %343 = vmatpush1.msra.mxu0 0.0
      %344 = vmatprep.subr.mxu0 0.0
      %345 = vmatpush1.msra.mxu0 0.0
      %346 = vmatprep.subr.mxu0 0.0
      %347 = vmatpush1.msra.mxu0 0.0
      %348 = vmatprep.subr.mxu0 0.0
      %349 = vmatpush1.msra.mxu0 0.0
      %350 = vmatprep.subr.mxu0 0.0
      %351 = vmatpush1.msra.mxu0 0.0
      %352 = vmatprep.subr.mxu0 0.0
      %353 = vmatpush1.msra.mxu0 0.0
      %354 = vmatprep.subr.mxu0 0.0
      %355 = vmatpush1.msra.mxu0 0.0
      %356 = vmatprep.subr.mxu0 0.0
      %357 = vmatpush1.msra.mxu0 0.0
      %358 = vmatprep.subr.mxu0 0.0
      %359 = vmatpush1.msra.mxu0 0.0
      %360 = vmatprep.subr.mxu0 0.0
      %361 = vmatpush1.msra.mxu0 0.0
      %362 = vmatprep.subr.mxu0 0.0
      %363 = vmatpush1.msra.mxu0 0.0
      %364 = vmatprep.subr.mxu0 0.0
      %365 = vmatpush1.msra.mxu0 0.0
      %366 = vmatprep.subr.mxu0 0.0
      %367 = vmatpush1.msra.mxu0 0.0
      %368 = vmatprep.subr.mxu0 0.0
      %369 = vmatpush1.msra.mxu0 0.0
      %370 = vmatprep.subr.mxu0 0.0
      %371 = vmatpush1.msra.mxu0 0.0
      %372 = vmatprep.subr.mxu0 0.0
      %373 = vmatpush1.msra.mxu0 0.0
      %374 = vmatprep.subr.mxu0 0.0
      %375 = vmatpush1.msra.mxu0 0.0
      %376 = vmatprep.subr.mxu0 0.0
      %377 = vmatpush1.msra.mxu0 0.0
      %378 = vmatprep.subr.mxu0 0.0
      %379 = vmatpush1.msra.mxu0 0.0
      %380 = vmatprep.subr.mxu0 0.0
      %381 = vmatpush1.msra.mxu0 0.0
      %382 = vmatprep.subr.mxu0 0.0
      %383 = vmatpush1.msra.mxu0 0.0
      %384 = vmatprep.subr.mxu0 0.0
      %385 = vmatpush1.msra.mxu0 0.0
      %386 = vmatprep.subr.mxu0 0.0
      %387 = vmatpush1.msra.mxu0 0.0
      %388 = vmatprep.subr.mxu0 0.0
      %389 = vmatpush1.msra.mxu0 0.0
      %390 = vmatprep.subr.mxu0 0.0
      %391 = vmatpush1.msra.mxu0 0.0
      %392 = vmatprep.subr.mxu0 0.0
      %393 = vmatpush1.msra.mxu0 0.0
      %394 = vmatprep.subr.mxu0 0.0
      %395 = vmatpush1.msra.mxu0 0.0
      %396 = vmatprep.subr.mxu0 0.0
      %397 = vmatpush1.msra.mxu0 0.0
      %398 = vmatprep.mubr.f32.mxu0 0.0
      %399 = vmatmul.mubr.f32.gmra.mrb[0].mxu0 %v323
      %v400 = vpop.f32.mrb[0].mxu0
      %v401 = vadd.f32 0.0, %v400
      %v402 = vpop.f32.mrb[0].mxu0
      %v403 = vadd.f32 0.0, %v402
      %404 = vmatprep.mubr.f32.mxu0 0.0
      %405 = vmatmul.mubr.f32.gmra.mrb[0].mxu0 %v326
      %v406 = vpop.f32.mrb[0].mxu0
      %v407 = vadd.f32 0.0, %v406
      %v408 = vpop.f32.mrb[0].mxu0
      %v409 = vadd.f32 0.0, %v408
      %410 = vmatprep.mubr.f32.mxu0 0.0
      %411 = vmatmul.mubr.f32.gmra.mrb[0].mxu0 %v329
      %v412 = vpop.f32.mrb[0].mxu0
      %v413 = vadd.f32 0.0, %v412
      %v414 = vpop.f32.mrb[0].mxu0
      %v415 = vadd.f32 0.0, %v414
      %416 = vmatprep.mubr.f32.mxu0 0.0
      %417 = vmatmul.mubr.f32.gmra.mrb[0].mxu0 %v332
      %v418 = vpop.f32.mrb[0].mxu0
      %v419 = vadd.f32 0.0, %v418
      %v420 = vpop.f32.mrb[0].mxu0
      %v421 = vadd.f32 0.0, %v420
      %422 = vdwg.mxu0
      %423 = vst [vmem:[%s270] sm:$0xff] %v401
      %424 = vst [vmem:[%s270 + $0x8] sm:$0xff] %v403
      %425 = vst [vmem:[%s270 + $0x10] sm:$0xff] %v407
      %426 = vst [vmem:[%s270 + $0x18] sm:$0xff] %v409
      %427 = vst [vmem:[%s270 + $0x20] sm:$0xff] %v413
      %428 = vst [vmem:[%s270 + $0x28] sm:$0xff] %v415
      %429 = vst [vmem:[%s270 + $0x30] sm:$0xff] %v419
      %430 = vst [vmem:[%s270 + $0x38] sm:$0xff] %v421
      %v431 = vadd.f32 %v401, %v403
      %432 = vadd.xlane.f32.xlu0 %v431
      %v433 = vpop.xlane.xlu0 %432
      %v434 = vadd.f32 %v407, %v409
      %435 = vadd.xlane.f32.xlu0 %v434
      %v436 = vpop.xlane.xlu0 %435
      %v437 = vadd.f32 %v413, %v415
      %438 = vadd.xlane.f32.xlu0 %v437
      %v439 = vpop.xlane.xlu0 %438
      %v440 = vadd.f32 %v419, %v421
      %441 = vadd.xlane.f32.xlu0 %v440
      %v442 = vpop.xlane.xlu0 %441
      %v443 = vmul.f32 %v401, %v401
      %v444 = vmul.f32 %v403, %v403
      %v445 = vmul.f32 %v407, %v407
      %v446 = vmul.f32 %v409, %v409
      %v447 = vmul.f32 %v413, %v413
      %v448 = vmul.f32 %v415, %v415
      %v449 = vmul.f32 %v419, %v419
      %v450 = vmul.f32 %v421, %v421
      %v451 = vadd.f32 %v443, %v444
      %452 = vadd.xlane.f32.xlu0 %v451
      %v453 = vpop.xlane.xlu0 %452
      %v454 = vadd.f32 %v445, %v446
      %455 = vadd.xlane.f32.xlu0 %v454
      %v456 = vpop.xlane.xlu0 %455
      %v457 = vadd.f32 %v447, %v448
      %458 = vadd.xlane.f32.xlu0 %v457
      %v459 = vpop.xlane.xlu0 %458
      %v460 = vadd.f32 %v449, %v450
      %461 = vadd.xlane.f32.xlu0 %v460
      %v462 = vpop.xlane.xlu0 %461
      %vm463 = vcmask 7168
      %v464 = vsel %vm463, %v433, %v453
      %v465 = vsel %vm463, %v436, %v456
      %v466 = vsel %vm463, %v439, %v459
      %v467 = vsel %vm463, %v442, %v462
      %p468 = scmp.eq.s32.totalorder %s22, 0
      // Predicated region
      $region37: #{resblock_forward.6} parent=35 // pred_check
        %p469 = pneg %p468
      $region38: #{resblock_forward.6} parent=35 // pred_check_branch
        %471 = sbr.rel (%p469) target = $region40
      $region39: #{resblock_forward.6} parent=35 // pred_region
        %vm472 = vcmask 15360
        %473 = vst.msk [vmem:[%s276] sm:$0xff] %vm472, %v464
        %474 = vst.msk [vmem:[%s276 + $0x8] sm:$0xff] %vm472, %v465
        %475 = vst.msk [vmem:[%s276 + $0x10] sm:$0xff] %vm472, %v466
        %476 = vst.msk [vmem:[%s276 + $0x18] sm:$0xff] %vm472, %v467
      $region40: #{resblock_forward.6} parent=35 // pred_fallthru
        _
      %p477 = scmp.ne.s32.totalorder %s22, 0
      // Predicated region
      $region41: #{resblock_forward.6} parent=35 // pred_check
        %p478 = pneg %p477
      $region42: #{resblock_forward.6} parent=35 // pred_check_branch
        %480 = sbr.rel (%p478) target = $region44
      $region43: #{resblock_forward.6} parent=35 // pred_region
        %v481 = vld [vmem:[%s276] sm:$0xff]
        %v482 = vld [vmem:[%s276 + $0x8] sm:$0xff]
        %v483 = vld [vmem:[%s276 + $0x10] sm:$0xff]
        %v484 = vld [vmem:[%s276 + $0x18] sm:$0xff]
        %v485 = vadd.f32 %v481, %v464
        %v486 = vadd.f32 %v482, %v465
        %v487 = vadd.f32 %v483, %v466
        %v488 = vadd.f32 %v484, %v467
        %vm489 = vcmask 15360
        %490 = vst.msk [vmem:[%s276] sm:$0xff] %vm489, %v485
        %491 = vst.msk [vmem:[%s276 + $0x8] sm:$0xff] %vm489, %v486
        %492 = vst.msk [vmem:[%s276 + $0x10] sm:$0xff] %vm489, %v487
        %493 = vst.msk [vmem:[%s276 + $0x18] sm:$0xff] %vm489, %v488
      $region44: #{resblock_forward.6} parent=35 // pred_fallthru
        _
      %s494 = smul.u32 2, %s22
      %p495 = scmp.lt.s32.totalorder %s21, 1
      %s496 = scalar_select %p495, %s21, 1
      %p497 = scmp.lt.s32.totalorder %s494, 1
      %s498 = scalar_select %p497, %s494, 1
      %s499 = smul.addr %s496, 8
      %s500 = sadd.s32 %s498, %s499
      %s501 = smul.addr %s500, 8
      %s502 = scalar_lea.vmem %s4, %s501
      %p503 = scmp.lt.s32.totalorder %s21, 1
      %s504 = scalar_select %p503, %s21, 1
      %s505 = smul.addr %s504, 4
      %s506 = smul.addr %s505, 8
      %s507 = scalar_lea.vmem %s5, %s506
      // Predicated region
      $region45: #{resblock_forward.6} parent=35 // pred_check
        %p508 = pneg %p140
      $region46: #{resblock_forward.6} parent=35 // pred_check_branch
        %510 = sbr.rel (%p508) target = $region48
      $region47: #{resblock_forward.6} parent=35 // pred_region
        %s511 = smul.u32 2, %s22
      $region48: #{resblock_forward.6} parent=35 // pred_fallthru
        _
      // Predicated region
      $region49: #{resblock_forward.6} parent=35 // pred_check
        %p512 = pneg %p166
      $region50: #{resblock_forward.6} parent=35 // pred_check_branch
        %514 = sbr.rel (%p512) target = $region52
      $region51: #{resblock_forward.6} parent=35 // pred_region
        _
      $region52: #{resblock_forward.6} parent=35 // pred_fallthru
        _
    $region36: #{resblock_forward.6} parent=5 // pred_fallthru
      _
    %p515 = scmp.le.s32.totalorder 2, %s12
    // Predicated region
    $region53: #{resblock_forward.6} parent=5 // pred_check
      %p516 = pneg %p515
    $region54: #{resblock_forward.6} parent=5 // pred_check_branch
      %518 = sbr.rel (%p516) target = $region56
    $region55: #{resblock_forward.6} parent=5 // pred_region
      %s519 = ssub.s32 %s12, 2
      // Predicated region
      $region57: #{resblock_forward.6} parent=55 // pred_check
        %p520 = pneg %p146
      $region58: #{resblock_forward.6} parent=55 // pred_check_branch
        %522 = sbr.rel (%p520) target = $region60
      $region59: #{resblock_forward.6} parent=55 // pred_region
        %s523 = smul.u32 2, %s24
        %p524 = scmp.lt.s32.totalorder %s23, 1
        %s525 = scalar_select %p524, %s23, 1
        %p526 = scmp.lt.s32.totalorder %s523, 1
        %s527 = scalar_select %p526, %s523, 1
        %s528 = smul.addr %s525, 8
        %s529 = sadd.s32 %s527, %s528
        %s530 = smul.addr %s529, 8
        %s531 = scalar_lea.vmem %s4, %s530
      $region60: #{resblock_forward.6} parent=55 // pred_fallthru
        _
      // Predicated region
      $region61: #{resblock_forward.6} parent=55 // pred_check
        %p532 = pneg %p172
      $region62: #{resblock_forward.6} parent=55 // pred_check_branch
        %534 = sbr.rel (%p532) target = $region64
      $region63: #{resblock_forward.6} parent=55 // pred_region
        %p535 = scmp.lt.s32.totalorder %s23, 1
        %s536 = scalar_select %p535, %s23, 1
        %s537 = smul.addr %s536, 4
        %s538 = smul.addr %s537, 8
        %s539 = scalar_lea.vmem %s5, %s538
      $region64: #{resblock_forward.6} parent=55 // pred_fallthru
        _
    $region56: #{resblock_forward.6} parent=5 // pred_fallthru
      _
  $region6: #{resblock_forward.6} parent=0 // loop_footer
    %s16 = sadd.s32 1, %s12
  $region7: #{resblock_forward.6} parent=0 // loop_footer_branch
    %11 = sbr.rel target = $region3
  $region8: #{resblock_forward.6} parent=0 // loop_exit
    _

// kernel: resblock_forward.7
$region0: #{resblock_forward.7}
  #allocation0 [shape = 'u32[]', space=smem, size = 0x4, offset = 0x4, fixed_abs, tag = 'smem constant byte address 0x4 - core index']
  #allocation1 [shape = 'u32[144,128]{1,0:T(1,128)}', space=vmem, size = 0x12000, scoped, tag = 'internal scratch']
  %s0 = inlined_call_operand.vmem [shape: f32[2,32,256], index: 0, kind: input, shape index: {}]
  %s1 = inlined_call_operand.vmem [shape: f32[32,1], index: 1, kind: input, shape index: {}]
  %s2 = inlined_call_operand.vmem [shape: f32[32,1], index: 2, kind: input, shape index: {}]
  %s3 = inlined_call_operand.vmem [shape: f32[2,32,256], index: 3, kind: input, shape index: {}]
  %s4 = inlined_call_operand.vmem [shape: f32[2,32,256], index: 4, kind: output, shape index: {}]
  %s5 = sld [smem:[#allocation0]]
  $region49: #{resblock_forward.7} parent=0
    _
  %s7 = ssub.s32 1, %s5
  %s8 = scalar_select 0, %s7, %s5
  loop: start=0, step=1, limit=4
  $region2: #{resblock_forward.7} parent=0 // loop_pre_header
    _
  $region3: #{resblock_forward.7} parent=0 // loop_header
    %s10 = sphi 0, %s14
    %p11 = scmp.ge.s32.totalorder %s10, 4
    %s17 = sphi 0, %s29
    %s18 = sphi 0, %s25
    %s19 = sphi 0, %s17
    %s20 = sphi 0, %s18
    %s21 = sphi 0, %s19
    %s22 = sphi 0, %s20
    %s34 = sphi 0, %s36
    %s37 = sphi 0, %s34
    %s38 = sphi 0, %s37
    %s54 = sphi 0, %s38
    %s58 = sphi 0, %s58
    %s60 = sphi 0, %s58
    %s61 = sphi 0, %s60
    %s75 = sphi 0, %s61
    %s79 = sphi 0, %s79
    %s81 = sphi 0, %s79
    %s82 = sphi 0, %s81
    %s96 = sphi 0, %s82
    %s104 = sphi 0, %s106
    %s107 = sphi 0, %s104
    %s108 = sphi 0, %s107
    %s124 = sphi 0, %s108
    %s132 = sphi 0, %s134
    %s135 = sphi 0, %s132
    %s136 = sphi 0, %s135
    %s152 = sphi 0, %s136
  $region4: #{resblock_forward.7} parent=0 // loop_header_branch
    %13 = sbr.rel (%p11) target = $region8
  $region5: #{resblock_forward.7} parent=0 // loop_body
    %s15 = ssub.s32 %s10, 1
    %s16 = ssub.s32 %s10, 2
    %s23 = sadd.s32 1, %s18
    %p24 = scmp.ge.s32.totalorder %s23, 1
    %s25 = scalar_select %p24, 0, %s23
    %s26 = sadd.s32 1, %s17
    %s27 = scalar_select %p24, %s26, %s17
    %p28 = scmp.ge.s32.totalorder %s27, 2
    %s29 = scalar_select %p28, 0, %s27
    %s30 = ssub.s32 %s17, %s29
    %s31 = ssub.s32 %s18, %s25
    %s32 = sor.u32 %s30, %s31
    %p33 = scmp.eq.s32.totalorder %s32, 0
    %s35 = sadd.s32 %s34, 1
    %s36 = scalar_select %p33, %s34, %s35
    %p39 = pneg %p33
    %p40 = scmp.eq.s32.totalorder %s10, 1
    %p41 = por %p39, %p40
    %p42 = scmp.ne.s32.totalorder %s34, %s37
    %p43 = scmp.eq.s32.totalorder %s10, 0
    %p44 = por %p42, %p43
    %p45 = scmp.ne.s32.totalorder %s34, %s37
    %p46 = scmp.eq.s32.totalorder %s15, 1
    %p47 = por %p45, %p46
    %p48 = scmp.ne.s32.totalorder %s37, %s38
    %p49 = scmp.eq.s32.totalorder %s15, 0
    %p50 = por %p48, %p49
    %p51 = scmp.ne.s32.totalorder %s37, %s38
    %p52 = scmp.eq.s32.totalorder %s16, 1
    %p53 = por %p51, %p52
    %p55 = scmp.ne.s32.totalorder %s38, %s54
    %p56 = scmp.eq.s32.totalorder %s16, 0
    %p57 = por %p55, %p56
    %s59 = sadd.s32 %s58, 1
    %p62 = scmp.eq.s32.totalorder %s10, 1
    %p63 = scmp.ne.s32.totalorder %s58, %s60
    %p64 = scmp.eq.s32.totalorder %s10, 0
    %p65 = por %p63, %p64
    %p66 = scmp.ne.s32.totalorder %s58, %s60
    %p67 = scmp.eq.s32.totalorder %s15, 1
    %p68 = por %p66, %p67
    %p69 = scmp.ne.s32.totalorder %s60, %s61
    %p70 = scmp.eq.s32.totalorder %s15, 0
    %p71 = por %p69, %p70
    %p72 = scmp.ne.s32.totalorder %s60, %s61
    %p73 = scmp.eq.s32.totalorder %s16, 1
    %p74 = por %p72, %p73
    %p76 = scmp.ne.s32.totalorder %s61, %s75
    %p77 = scmp.eq.s32.totalorder %s16, 0
    %p78 = por %p76, %p77
    %s80 = sadd.s32 %s79, 1
    %p83 = scmp.eq.s32.totalorder %s10, 1
    %p84 = scmp.ne.s32.totalorder %s79, %s81
    %p85 = scmp.eq.s32.totalorder %s10, 0
    %p86 = por %p84, %p85
    %p87 = scmp.ne.s32.totalorder %s79, %s81
    %p88 = scmp.eq.s32.totalorder %s15, 1
    %p89 = por %p87, %p88
    %p90 = scmp.ne.s32.totalorder %s81, %s82
    %p91 = scmp.eq.s32.totalorder %s15, 0
    %p92 = por %p90, %p91
    %p93 = scmp.ne.s32.totalorder %s81, %s82
    %p94 = scmp.eq.s32.totalorder %s16, 1
    %p95 = por %p93, %p94
    %p97 = scmp.ne.s32.totalorder %s82, %s96
    %p98 = scmp.eq.s32.totalorder %s16, 0
    %p99 = por %p97, %p98
    %s100 = ssub.s32 %s17, %s29
    %s101 = ssub.s32 %s18, %s25
    %s102 = sor.u32 %s100, %s101
    %p103 = scmp.eq.s32.totalorder %s102, 0
    %s105 = sadd.s32 %s104, 1
    %s106 = scalar_select %p103, %s104, %s105
    %p109 = pneg %p103
    %p110 = scmp.eq.s32.totalorder %s10, 1
    %p111 = por %p109, %p110
    %p112 = scmp.ne.s32.totalorder %s104, %s107
    %p113 = scmp.eq.s32.totalorder %s10, 0
    %p114 = por %p112, %p113
    %p115 = scmp.ne.s32.totalorder %s104, %s107
    %p116 = scmp.eq.s32.totalorder %s15, 1
    %p117 = por %p115, %p116
    %p118 = scmp.ne.s32.totalorder %s107, %s108
    %p119 = scmp.eq.s32.totalorder %s15, 0
    %p120 = por %p118, %p119
    %p121 = scmp.ne.s32.totalorder %s107, %s108
    %p122 = scmp.eq.s32.totalorder %s16, 1
    %p123 = por %p121, %p122
    %p125 = scmp.ne.s32.totalorder %s108, %s124
    %p126 = scmp.eq.s32.totalorder %s16, 0
    %p127 = por %p125, %p126
    %s128 = ssub.s32 %s17, %s29
    %s129 = ssub.s32 %s18, %s25
    %s130 = sor.u32 %s128, %s129
    %p131 = scmp.eq.s32.totalorder %s130, 0
    %s133 = sadd.s32 %s132, 1
    %s134 = scalar_select %p131, %s132, %s133
    %p137 = pneg %p131
    %p138 = scmp.eq.s32.totalorder %s10, 1
    %p139 = por %p137, %p138
    %p140 = scmp.ne.s32.totalorder %s132, %s135
    %p141 = scmp.eq.s32.totalorder %s10, 0
    %p142 = por %p140, %p141
    %p143 = scmp.ne.s32.totalorder %s132, %s135
    %p144 = scmp.eq.s32.totalorder %s15, 1
    %p145 = por %p143, %p144
    %p146 = scmp.ne.s32.totalorder %s135, %s136
    %p147 = scmp.eq.s32.totalorder %s15, 0
    %p148 = por %p146, %p147
    %p149 = scmp.ne.s32.totalorder %s135, %s136
    %p150 = scmp.eq.s32.totalorder %s16, 1
    %p151 = por %p149, %p150
    %p153 = scmp.ne.s32.totalorder %s136, %s152
    %p154 = scmp.eq.s32.totalorder %s16, 0
    %p155 = por %p153, %p154
    %p156 = scmp.le.s32.totalorder 1, %s10
    %p157 = scmp.lt.s32.totalorder %s10, 3
    %p158 = pnand %p156, %p157
    %p159 = pneg %p158
    // Predicated region
    $region9: #{resblock_forward.7} parent=5 // pred_check
      _
    $region10: #{resblock_forward.7} parent=5 // pred_check_branch
      %161 = sbr.rel (%p158) target = $region12
    $region11: #{resblock_forward.7} parent=5 // pred_region
      %s162 = ssub.s32 %s10, 1
      // Predicated region
      $region13: #{resblock_forward.7} parent=11 // pred_check
        %p163 = pneg %p71
      $region14: #{resblock_forward.7} parent=11 // pred_check_branch
        %165 = sbr.rel (%p163) target = $region16
      $region15: #{resblock_forward.7} parent=11 // pred_region
        _
      $region16: #{resblock_forward.7} parent=11 // pred_fallthru
        _
      // Predicated region
      $region17: #{resblock_forward.7} parent=11 // pred_check
        %p166 = pneg %p92
      $region18: #{resblock_forward.7} parent=11 // pred_check_branch
        %168 = sbr.rel (%p166) target = $region20
      $region19: #{resblock_forward.7} parent=11 // pred_region
        _
      $region20: #{resblock_forward.7} parent=11 // pred_fallthru
        _
    $region12: #{resblock_forward.7} parent=5 // pred_fallthru
      _
    %p169 = scmp.lt.s32.totalorder %s10, 2
    // Predicated region
    $region21: #{resblock_forward.7} parent=5 // pred_check
      %p170 = pneg %p169
    $region22: #{resblock_forward.7} parent=5 // pred_check_branch
      %172 = sbr.rel (%p170) target = $region24
    $region23: #{resblock_forward.7} parent=5 // pred_region
      // Predicated region
      $region25: #{resblock_forward.7} parent=23 // pred_check
        %p173 = pneg %p44
      $region26: #{resblock_forward.7} parent=23 // pred_check_branch
        %175 = sbr.rel (%p173) target = $region28
      $region27: #{resblock_forward.7} parent=23 // pred_region
        %s176 = smul.u32 2, %s18
        %p177 = scmp.lt.s32.totalorder %s17, 1
        %s178 = scalar_select %p177, %s17, 1
        %p179 = scmp.lt.s32.totalorder %s176, 1
        %s180 = scalar_select %p179, %s176, 1
        %s181 = smul.addr %s178, 8
        %s182 = sadd.s32 %s180, %s181
        %s183 = smul.addr %s182, 8
        %s184 = scalar_lea.vmem %s0, %s183
        %s185 = smul.u32 2, %s18
      $region28: #{resblock_forward.7} parent=23 // pred_fallthru
        _
      // Predicated region
      $region29: #{resblock_forward.7} parent=23 // pred_check
        %p186 = pneg %p114
      $region30: #{resblock_forward.7} parent=23 // pred_check_branch
        %188 = sbr.rel (%p186) target = $region32
      $region31: #{resblock_forward.7} parent=23 // pred_region
        %s189 = smul.u32 2, %s18
        %p190 = scmp.lt.s32.totalorder %s17, 1
        %s191 = scalar_select %p190, %s17, 1
        %p192 = scmp.lt.s32.totalorder %s189, 1
        %s193 = scalar_select %p192, %s189, 1
        %s194 = smul.addr %s191, 8
        %s195 = sadd.s32 %s193, %s194
        %s196 = smul.addr %s195, 8
        %s197 = scalar_lea.vmem %s3, %s196
        %s198 = smul.u32 2, %s18
      $region32: #{resblock_forward.7} parent=23 // pred_fallthru
        _
    $region24: #{resblock_forward.7} parent=5 // pred_fallthru
      _
    %p199 = scmp.le.s32.totalorder 1, %s10
    %p200 = scmp.lt.s32.totalorder %s10, 3
    %p201 = pnand %p199, %p200
    %p202 = pneg %p201
    // Predicated region
    $region33: #{resblock_forward.7} parent=5 // pred_check
      _
    $region34: #{resblock_forward.7} parent=5 // pred_check_branch
      %204 = sbr.rel (%p201) target = $region36
    $region35: #{resblock_forward.7} parent=5 // pred_region
      %s205 = ssub.s32 %s10, 1
      %s206 = smul.u32 2, %s20
      %p207 = scmp.lt.s32.totalorder %s19, 1
      %s208 = scalar_select %p207, %s19, 1
      %p209 = scmp.lt.s32.totalorder %s206, 1
      %s210 = scalar_select %p209, %s206, 1
      %s211 = smul.addr %s208, 8
      %s212 = sadd.s32 %s210, %s211
      %s213 = smul.addr %s212, 8
      %s214 = scalar_lea.vmem %s0, %s213
      %p215 = pneg %p50
      %p216 = pneg %p47
      %p217 = pneg %p71
      %p218 = pneg %p68
      %p219 = pneg %p92
      %p220 = pneg %p89
      %s221 = smul.u32 2, %s20
      %p222 = scmp.lt.s32.totalorder %s19, 1
      %s223 = scalar_select %p222, %s19, 1
      %p224 = scmp.lt.s32.totalorder %s221, 1
      %s225 = scalar_select %p224, %s221, 1
      %s226 = smul.addr %s223, 8
      %s227 = sadd.s32 %s225, %s226
      %s228 = smul.addr %s227, 8
      %s229 = scalar_lea.vmem %s3, %s228
      %p230 = pneg %p120
      %p231 = pneg %p117
      %p232 = pneg %p148
      %p233 = pneg %p145
      %s234 = smul.u32 2, %s20
      %p235 = scmp.lt.s32.totalorder %s19, 1
      %s236 = scalar_select %p235, %s19, 1
      %p237 = scmp.lt.s32.totalorder %s234, 1
      %s238 = scalar_select %p237, %s234, 1
      %s239 = smul.addr %s236, 8
      %s240 = sadd.s32 %s238, %s239
      %s241 = smul.addr %s240, 8
      %s242 = scalar_lea.vmem %s4, %s241
      %s243 = smul.u32 2, %s20
      %p244 = scmp.lt.s32.totalorder %s19, 1
      %s245 = scalar_select %p244, %s19, 1
      %p246 = scmp.lt.s32.totalorder %s243, 1
      %s247 = scalar_select %p246, %s243, 1
      %s248 = smul.addr %s245, 8
      %s249 = sadd.s32 %s247, %s248
      %s250 = smul.addr %s249, 8
      %s251 = scalar_lea.vmem %s0, %s250
      %s252 = smul.u32 2, %s20
      %s253 = smul.u32 2, %s20
      %p254 = scmp.lt.s32.totalorder %s19, 1
      %s255 = scalar_select %p254, %s19, 1
      %p256 = scmp.lt.s32.totalorder %s253, 1
      %s257 = scalar_select %p256, %s253, 1
      %s258 = smul.addr %s255, 8
      %s259 = sadd.s32 %s257, %s258
      %s260 = smul.addr %s259, 8
      %s261 = scalar_lea.vmem %s3, %s260
      %s262 = smul.u32 2, %s20
      %s263 = smul.u32 2, %s20
      %p264 = scmp.lt.s32.totalorder %s19, 1
      %s265 = scalar_select %p264, %s19, 1
      %p266 = scmp.lt.s32.totalorder %s263, 1
      %s267 = scalar_select %p266, %s263, 1
      %s268 = smul.addr %s265, 8
      %s269 = sadd.s32 %s267, %s268
      %s270 = smul.addr %s269, 8
      %s271 = scalar_lea.vmem %s4, %s270
      %s272 = smul.u32 2, %s20
      %v273 = vld [vmem:[%s251] sm:$0xff]
      %v274 = vld [vmem:[%s251 + $0x8] sm:$0xff]
      %v275 = vld [vmem:[%s251 + $0x10] sm:$0xff]
      %v276 = vld [vmem:[%s251 + $0x18] sm:$0xff]
      %v277 = vld [vmem:[%s251 + $0x20] sm:$0xff]
      %v278 = vld [vmem:[%s251 + $0x28] sm:$0xff]
      %v279 = vld [vmem:[%s251 + $0x30] sm:$0xff]
      %v280 = vld [vmem:[%s251 + $0x38] sm:$0xff]
      %v281 = vld [vmem:[%s1] sm:$0xff]
      %v282 = vld [vmem:[%s1 + $0x8] sm:$0xff]
      %v283 = vld [vmem:[%s1 + $0x10] sm:$0xff]
      %v284 = vld [vmem:[%s1 + $0x18] sm:$0xff]
      %286 = vset.pattern.permute.xlu0 0
      %287 = vperm.xlu0 %286, %v281
      %v288 = vpop.permute.xlu0 %287
      %291 = vset.pattern.permute.xlu0 0
      %292 = vperm.xlu0 %291, %v282
      %v293 = vpop.permute.xlu0 %292
      %296 = vset.pattern.permute.xlu0 0
      %297 = vperm.xlu0 %296, %v283
      %v298 = vpop.permute.xlu0 %297
      %301 = vset.pattern.permute.xlu0 0
      %302 = vperm.xlu0 %301, %v284
      %v303 = vpop.permute.xlu0 %302
      %v305 = vmul.f32 %v273, %v288
      %v306 = vmul.f32 %v274, %v288
      %v307 = vmul.f32 %v275, %v293
      %v308 = vmul.f32 %v276, %v293
      %v309 = vmul.f32 %v277, %v298
      %v310 = vmul.f32 %v278, %v298
      %v311 = vmul.f32 %v279, %v303
      %v312 = vmul.f32 %v280, %v303
      %v313 = vld [vmem:[%s2] sm:$0xff]
      %v314 = vld [vmem:[%s2 + $0x8] sm:$0xff]
      %v315 = vld [vmem:[%s2 + $0x10] sm:$0xff]
      %v316 = vld [vmem:[%s2 + $0x18] sm:$0xff]
      %318 = vset.pattern.permute.xlu0 0
      %319 = vperm.xlu0 %318, %v313
      %v320 = vpop.permute.xlu0 %319
      %323 = vset.pattern.permute.xlu0 0
      %324 = vperm.xlu0 %323, %v314
      %v325 = vpop.permute.xlu0 %324
      %328 = vset.pattern.permute.xlu0 0
      %329 = vperm.xlu0 %328, %v315
      %v330 = vpop.permute.xlu0 %329
      %333 = vset.pattern.permute.xlu0 0
      %334 = vperm.xlu0 %333, %v316
      %v335 = vpop.permute.xlu0 %334
      %v337 = vadd.f32 %v305, %v320
      %v338 = vadd.f32 %v306, %v320
      %v339 = vadd.f32 %v307, %v325
      %v340 = vadd.f32 %v308, %v325
      %v341 = vadd.f32 %v309, %v330
      %v342 = vadd.f32 %v310, %v330
      %v343 = vadd.f32 %v311, %v335
      %v344 = vadd.f32 %v312, %v335
      %v345 = vld [vmem:[%s261] sm:$0xff]
      %v346 = vld [vmem:[%s261 + $0x8] sm:$0xff]
      %v347 = vld [vmem:[%s261 + $0x10] sm:$0xff]
      %v348 = vld [vmem:[%s261 + $0x18] sm:$0xff]
      %v349 = vld [vmem:[%s261 + $0x20] sm:$0xff]
      %v350 = vld [vmem:[%s261 + $0x28] sm:$0xff]
      %v351 = vld [vmem:[%s261 + $0x30] sm:$0xff]
      %v352 = vld [vmem:[%s261 + $0x38] sm:$0xff]
      %v353 = vadd.f32 %v337, %v345
      %v354 = vadd.f32 %v338, %v346
      %v355 = vadd.f32 %v339, %v347
      %v356 = vadd.f32 %v340, %v348
      %v357 = vadd.f32 %v341, %v349
      %v358 = vadd.f32 %v342, %v350
      %v359 = vadd.f32 %v343, %v351
      %v360 = vadd.f32 %v344, %v352
      %v361 = vmax.f32 %v353, 0.0
      %v362 = vmax.f32 %v354, 0.0
      %v363 = vmax.f32 %v355, 0.0
      %v364 = vmax.f32 %v356, 0.0
      %v365 = vmax.f32 %v357, 0.0
      %v366 = vmax.f32 %v358, 0.0
      %v367 = vmax.f32 %v359, 0.0
      %v368 = vmax.f32 %v360, 0.0
      %369 = vst [vmem:[%s271] sm:$0xff] %v361
      %370 = vst [vmem:[%s271 + $0x8] sm:$0xff] %v362
      %371 = vst [vmem:[%s271 + $0x10] sm:$0xff] %v363
      %372 = vst [vmem:[%s271 + $0x18] sm:$0xff] %v364
      %373 = vst [vmem:[%s271 + $0x20] sm:$0xff] %v365
      %374 = vst [vmem:[%s271 + $0x28] sm:$0xff] %v366
      %375 = vst [vmem:[%s271 + $0x30] sm:$0xff] %v367
      %376 = vst [vmem:[%s271 + $0x38] sm:$0xff] %v368
      %s377 = smul.u32 2, %s20
      %p378 = scmp.lt.s32.totalorder %s19, 1
      %s379 = scalar_select %p378, %s19, 1
      %p380 = scmp.lt.s32.totalorder %s377, 1
      %s381 = scalar_select %p380, %s377, 1
      %s382 = smul.addr %s379, 8
      %s383 = sadd.s32 %s381, %s382
      %s384 = smul.addr %s383, 8
      %s385 = scalar_lea.vmem %s4, %s384
      // Predicated region
      $region37: #{resblock_forward.7} parent=35 // pred_check
        %p386 = pneg %p145
      $region38: #{resblock_forward.7} parent=35 // pred_check_branch
        %388 = sbr.rel (%p386) target = $region40
      $region39: #{resblock_forward.7} parent=35 // pred_region
        %s389 = smul.u32 2, %s20
      $region40: #{resblock_forward.7} parent=35 // pred_fallthru
        _
    $region36: #{resblock_forward.7} parent=5 // pred_fallthru
      _
    %p390 = scmp.le.s32.totalorder 2, %s10
    // Predicated region
    $region41: #{resblock_forward.7} parent=5 // pred_check
      %p391 = pneg %p390
    $region42: #{resblock_forward.7} parent=5 // pred_check_branch
      %393 = sbr.rel (%p391) target = $region44
    $region43: #{resblock_forward.7} parent=5 // pred_region
      %s394 = ssub.s32 %s10, 2
      // Predicated region
      $region45: #{resblock_forward.7} parent=43 // pred_check
        %p395 = pneg %p151
      $region46: #{resblock_forward.7} parent=43 // pred_check_branch
        %397 = sbr.rel (%p395) target = $region48
      $region47: #{resblock_forward.7} parent=43 // pred_region
        %s398 = smul.u32 2, %s22
        %p399 = scmp.lt.s32.totalorder %s21, 1
        %s400 = scalar_select %p399, %s21, 1
        %p401 = scmp.lt.s32.totalorder %s398, 1
        %s402 = scalar_select %p401, %s398, 1
        %s403 = smul.addr %s400, 8
        %s404 = sadd.s32 %s402, %s403
        %s405 = smul.addr %s404, 8
        %s406 = scalar_lea.vmem %s4, %s405
      $region48: #{resblock_forward.7} parent=43 // pred_fallthru
        _
    $region44: #{resblock_forward.7} parent=5 // pred_fallthru
      _
  $region6: #{resblock_forward.7} parent=0 // loop_footer
    %s14 = sadd.s32 1, %s10
  $region7: #{resblock_forward.7} parent=0 // loop_footer_branch
    %9 = sbr.rel target = $region3
  $region8: #{resblock_forward.7} parent=0 // loop_exit
    _

</llo_original>
